<compile_context>
chip_gen: v5e
topology: v5e:2x2
jax: 0.10.0
libtpu: 0.0.40
codegen_flags: <defaults>
</compile_context>

<pallas_src>
import math

import numpy as np
import jax
import jax.numpy as jnp
from jax import lax
from jax.experimental import pallas as pl
from jax.experimental.pallas import tpu as pltpu


def _round_up(x, m):
    return ((x + m - 1) // m) * m


def _softplus(x):
    # PyTorch nn.Softplus(beta=1, threshold=20): x if x > 20 else log1p(exp(x))
    return jnp.where(x > 20.0, x, jnp.log1p(jnp.exp(jnp.minimum(x, 20.0))))


def _make_kernel(n_layers, tiles_per_split, window):
    """Grid (split, tile).  Ref order:
       scalar prefetch: tile->atom-type, tile->row-block, tile->conf-window-base,
                        tile->valid   (int32, length n_splits*tiles_per_split)
       inputs: desc (TM, nIn), conf ids (TM, 1) int32, then per-layer W (in,out)/b (1,out)
       output: (1, nConfPad) f32 per-split energy accumulator (resident across tiles).
    """

    def kernel(tt_ref, tb_ref, base_ref, valid_ref, desc_ref, conf_ref, *refs):
        del tt_ref, tb_ref              # only consumed by the index_maps
        out_ref = refs[-1]              # (1, nConfPad) f32
        wb = refs[:-1]
        s = pl.program_id(0)
        i = pl.program_id(1)
        g = s * tiles_per_split + i

        @pl.when(i == 0)                # first tile of this split -> zero accumulator
        def _():
            out_ref[...] = jnp.zeros_like(out_ref)

        @pl.when(valid_ref[g] == 1)     # skip MLP + scatter on padding-only tiles
        def _():
            x = desc_ref[...]                       # (TM, nIn), param dtype
            for l in range(n_layers):
                w = wb[2 * l][...]                  # (in_l, out_l), param dtype
                b = wb[2 * l + 1][...]              # (1, out_l), f32
                x = jnp.dot(x.astype(w.dtype), w,
                            preferred_element_type=jnp.float32) + b
                if l < n_layers - 1:                # Softplus after hidden layers (f32)
                    x = _softplus(x)
            # x: (TM, 1) f32 per-atom energies; pad rows killed by all-zero one-hot row.

            tm = x.shape[0]
            base = pl.multiple_of(base_ref[g], 128)  # 128-aligned conformer window base
            conf_ids = conf_ref[...]                 # (TM, 1) int32; pad rows are -1
            onehot = (conf_ids - base ==
                      lax.broadcasted_iota(jnp.int32, (tm, window), 1)
                      ).astype(jnp.bfloat16)         # narrow (TM, window) one-hot
            # index_add as an MXU contraction over the atom axis: e^T @ onehot
            contrib = lax.dot_general(
                x.astype(jnp.bfloat16), onehot,
                dimension_numbers=(((0,), (0,)), ((), ())),
                preferred_element_type=jnp.float32)  # (1, window) f32
            if window == out_ref.shape[-1]:
                out_ref[...] += contrib
            else:
                out_ref[:, pl.ds(base, window)] += contrib

    return kernel


def ani_net_forward(per_type_inputs, per_type_params, nconfs, *,
                    tile_m=1024, n_splits=2, param_dtype=jnp.float32):
    """ANINet.forward: finalEs (nConfs,) from per-atom-type descriptors.

    per_type_inputs: list of (desc (nAt_t, nIn), at2conf (nAt_t,)) per atom type
                     (the output of the DescriptorModule grouping; conformer ids within
                     a type are non-decreasing because the type sort is stable).
    per_type_params: list (per type) of flat [W0, b0, W1, b1, ...] with Wl (in, out),
                     bl (1, out); all types must share the same layer widths.
    """
    n_types = len(per_type_inputs)
    assert n_types == len(per_type_params) and n_types >= 1
    n_in = int(per_type_inputs[0][0].shape[1])
    n_layers = len(per_type_params[0]) // 2
    assert int(per_type_params[0][-1].shape[-1]) == 1, "AniAtomNet emits one energy/atom"
    for p in per_type_params:
        assert len(p) == 2 * n_layers
        for l in range(n_layers):
            assert p[2 * l].shape == per_type_params[0][2 * l].shape

    max_atoms = max(int(d.shape[0]) for d, _ in per_type_inputs)
    assert max_atoms >= 1, "need at least one atom"
    tile_m = max(128, _round_up(tile_m, 128))
    tile = min(tile_m, _round_up(max_atoms, 128))
    nconf_pad = _round_up(max(int(nconfs), 1), 128)      # lane-dense accumulator width

    # --- host-side ragged packing (mirrors DescriptorModule's sort/split) ---
    desc_blocks, conf_blocks, tile_type = [], [], []
    for t, (d, c) in enumerate(per_type_inputs):
        n = int(d.shape[0])
        if n == 0:
            continue
        n_pad = _round_up(n, tile)                       # pad only to the tile size
        db = np.zeros((n_pad, n_in), np.float32)
        db[:n] = np.asarray(d, dtype=np.float32)
        cb = np.full((n_pad,), -1, np.int32)             # pad atoms -> conformer -1
        cb[:n] = np.asarray(c, dtype=np.int32)
        desc_blocks.append(db)
        conf_blocks.append(cb)
        tile_type += [t] * (n_pad // tile)
    desc_np = np.concatenate(desc_blocks, axis=0)
    conf_np = np.concatenate(conf_blocks, axis=0)
    n_tiles = len(tile_type)

    # Per-tile 128-aligned conformer window: atoms within a type keep conformer order,
    # so each tile touches a contiguous conformer range.
    bases, spans = [], []
    for i in range(n_tiles):
        seg = conf_np[i * tile:(i + 1) * tile]
        real = seg[seg >= 0]
        b = (int(real.min()) // 128) * 128
        bases.append(b)
        spans.append(int(real.max()) - b + 1)
    window = min(nconf_pad, _round_up(max(spans), 128))
    bases = [min(b, nconf_pad - window) for b in bases]   # stays a multiple of 128

    # --- split tiles into contiguous chunks (megacore balance on v7x) ---
    n_splits = max(1, min(int(n_splits), n_tiles))
    tps = -(-n_tiles // n_splits)
    n_splits = -(-n_tiles // tps)
    total = n_splits * tps
    tile2type = np.zeros((total,), np.int32)
    tile2block = np.zeros((total,), np.int32)
    tile2base = np.zeros((total,), np.int32)
    tile2valid = np.zeros((total,), np.int32)
    tile2type[:n_tiles] = tile_type
    tile2block[:n_tiles] = np.arange(n_tiles, dtype=np.int32)
    tile2base[:n_tiles] = bases
    tile2valid[:n_tiles] = 1
    if total > n_tiles:   # dummy tail tiles reuse the last real block (no extra DMA)
        tile2type[n_tiles:] = tile_type[-1]
        tile2block[n_tiles:] = n_tiles - 1
        tile2base[n_tiles:] = bases[-1]

    desc = jnp.asarray(desc_np).astype(param_dtype)
    conf = jnp.asarray(conf_np).reshape(-1, 1)

    # Stack per-type weights: W_l -> (nTypes, in_l, out_l), b_l -> (nTypes, 1, out_l).
    stacked_params = []
    for l in range(n_layers):
        ws = jnp.stack([p[2 * l] for p in per_type_params]).astype(param_dtype)
        bs = jnp.stack([p[2 * l + 1] for p in per_type_params]).astype(jnp.float32)
        stacked_params += [ws, bs]

    def row_map(s, i, tt, tb, ba, tv):          # descriptor / conf-id row block
        return (tb[s * tps + i], 0)

    def type_map(s, i, tt, tb, ba, tv):         # per-type weight / bias block
        return (tt[s * tps + i], 0, 0)

    def out_map(s, i, tt, tb, ba, tv):          # per-split accumulator row
        return (s, 0, 0)

    in_specs = [
        pl.BlockSpec((tile, n_in), row_map),    # descriptor tile
        pl.BlockSpec((tile, 1), row_map),       # conformer-id tile
    ]
    for p in stacked_params:
        in_specs.append(pl.BlockSpec((None,) + p.shape[1:], type_map))

    out = pl.pallas_call(
        _make_kernel(n_layers, tps, window),
        out_shape=jax.ShapeDtypeStruct((n_splits, 1, nconf_pad), jnp.float32),
        grid_spec=pltpu.PrefetchScalarGridSpec(
            num_scalar_prefetch=4,
            grid=(n_splits, tps),
            in_specs=in_specs,
            out_specs=pl.BlockSpec((None, 1, nconf_pad), out_map),
        ),
        compiler_params=pltpu.CompilerParams(
            # split axis is independent (lets Mosaic shard it across TensorCores on
            # v7x); tile axis is a reduction into the per-split accumulator.
            dimension_semantics=("parallel", "arbitrary")),
    )(jnp.asarray(tile2type), jnp.asarray(tile2block),
      jnp.asarray(tile2base), jnp.asarray(tile2valid),
      desc, conf, *stacked_params)

    # Sum per-split contributions and drop conformer lane padding in plain JAX.
    return jnp.sum(out[:, 0, :nconfs], axis=0)


def group_by_atom_type(desc_flat, atom_types_flat, n_confs, n_atom_per_conf, uniq_types):
    """Host-side mirror of DescriptorModule.forward: build at2ConfNum, stable-sort
    atoms by type and split descriptors / conformer ids per unique atom type.
    (Uses int() on array values -> host helper only, not jittable.)"""
    at2conf = jnp.repeat(jnp.arange(n_confs, dtype=jnp.int32), n_atom_per_conf)
    order = jnp.argsort(atom_types_flat)           # stable grouping by type
    desc_sorted = desc_flat[order]
    conf_sorted = at2conf[order]
    counts = [int(jnp.sum(atom_types_flat == t)) for t in sorted(uniq_types)]
    per_type = []
    start = 0
    for c in counts:
        per_type.append((desc_sorted[start:start + c], conf_sorted[start:start + c]))
        start += c
    return per_type


def init_atom_net_params(key, n_inputs, layer_opts, n_outputs, gain=2.0):
    """Deterministic init matching AniAtomNet defaults:
       uniform(-gain/sqrt(fan_in), +gain/sqrt(fan_in)) weights, zero biases."""
    params = []
    fan_in = n_inputs
    widths = list(layer_opts) + [n_outputs]
    for w_out in widths:
        key, sub = jax.random.split(key)
        stdv = gain / math.sqrt(fan_in)
        w = jax.random.uniform(sub, (fan_in, w_out), jnp.float32, -stdv, stdv)
        b = jnp.zeros((1, w_out), jnp.float32)
        params += [w, b]
        fan_in = w_out
    return params, key


def ani_net_reference(per_type_inputs, per_type_params, nconfs, param_dtype=jnp.float32):
    """Pure-JAX reference mirroring the PyTorch forward (with the same optional
    low-precision input casts as the kernel; f32 accumulation / softplus)."""
    final_es = jnp.zeros((nconfs,), jnp.float32)
    for (desc, at2conf), params in zip(per_type_inputs, per_type_params):
        x = desc.astype(param_dtype)
        n_layers = len(params) // 2
        for l in range(n_layers):
            w = params[2 * l].astype(param_dtype)
            b = params[2 * l + 1].astype(jnp.float32)
            x = jnp.dot(x.astype(param_dtype), w,
                        preferred_element_type=jnp.float32) + b
            if l < n_layers - 1:
                x = _softplus(x)
        final_es = final_es.at[at2conf.astype(jnp.int32)].add(x.reshape(-1))
    return final_es


if __name__ == "__main__":
    key = jax.random.PRNGKey(0)

    # ---- Test 1: small shapes consistent with the module docstring -------------------
    # atomTypes=[1,6] (H,C), 64 descriptors, hidden [32,32], 1 energy, 4 confs x 8 atoms.
    atom_types_list = [1, 6]
    n_inputs, layer_opts, n_outputs = 64, [32, 32], 1
    n_confs, n_atom_per_conf = 4, 8

    per_type_params = []
    for _ in atom_types_list:
        params, key = init_atom_net_params(key, n_inputs, layer_opts, n_outputs, gain=2.0)
        per_type_params.append(params)

    # "DescriptorModule" stage: flat per-atom descriptors + atom types, group by type.
    # TODO(synk): descriptor_computer.computeDescriptorBatch has no spec here; random
    # descriptors stand in for its output.
    n_atoms_total = n_confs * n_atom_per_conf
    key, k_desc, k_types = jax.random.split(key, 3)
    desc_flat = jax.random.normal(k_desc, (n_atoms_total, n_inputs), jnp.float32)
    type_idx = jax.random.randint(k_types, (n_atoms_total,), 0, len(atom_types_list),
                                  jnp.int32)
    at_types_flat = jnp.array(atom_types_list, jnp.int32)[type_idx]
    per_type_inputs = group_by_atom_type(desc_flat, at_types_flat, n_confs,
                                         n_atom_per_conf, atom_types_list)

    es_f32 = ani_net_forward(per_type_inputs, per_type_params, n_confs,
                             param_dtype=jnp.float32)
    es_f32 = jax.block_until_ready(es_f32)
    ref_f32 = ani_net_reference(per_type_inputs, per_type_params, n_confs, jnp.float32)
    assert jnp.allclose(es_f32, ref_f32, rtol=2e-3, atol=2e-3), (es_f32, ref_f32)

    # bf16 descriptors/weights (HBM-bound lever on v6e/v7x), f32 accumulation inside.
    es_bf16 = ani_net_forward(per_type_inputs, per_type_params, n_confs,
                              param_dtype=jnp.bfloat16)
    es_bf16 = jax.block_until_ready(es_bf16)
    ref_bf16 = ani_net_reference(per_type_inputs, per_type_params, n_confs, jnp.bfloat16)
    assert jnp.allclose(es_bf16, ref_bf16, rtol=2e-2, atol=2e-2), (es_bf16, ref_bf16)

    # ---- Test 2: larger conformer batch to exercise the ragged tiles, the 1024-row ---
    # ---- tiles and the narrow windowed scatter (dynamic 128-aligned window base). ----
    n_confs2, n_atom_per_conf2 = 600, 16
    per_type_params2 = []
    for _ in atom_types_list:
        params, key = init_atom_net_params(key, n_inputs, layer_opts, n_outputs, gain=2.0)
        per_type_params2.append(params)

    n_atoms2 = n_confs2 * n_atom_per_conf2
    key, k_desc2, k_types2 = jax.random.split(key, 3)
    desc2 = jax.random.normal(k_desc2, (n_atoms2, n_inputs), jnp.float32)
    type_idx2 = jax.random.randint(k_types2, (n_atoms2,), 0, len(atom_types_list),
                                   jnp.int32)
    at_types2 = jnp.array(atom_types_list, jnp.int32)[type_idx2]
    per_type_inputs2 = group_by_atom_type(desc2, at_types2, n_confs2,
                                          n_atom_per_conf2, atom_types_list)

    es2 = ani_net_forward(per_type_inputs2, per_type_params2, n_confs2,
                          tile_m=1024, param_dtype=jnp.float32)
    es2 = jax.block_until_ready(es2)
    ref2 = ani_net_reference(per_type_inputs2, per_type_params2, n_confs2, jnp.float32)
    assert jnp.allclose(es2, ref2, rtol=1e-2, atol=3e-2), (
        float(jnp.max(jnp.abs(es2 - ref2))),)

    print("KERNEL_OK")
</pallas_src>

<mosaic_0001>
module attributes {stable_mosaic.version = 11 : i64} {
  func.func @kernel(%arg0: i32, %arg1: i32, %arg2: memref<2xi32, #tpu.memory_space<smem>>, %arg3: memref<2xi32, #tpu.memory_space<smem>>, %arg4: memref<2xi32, #tpu.memory_space<smem>>, %arg5: memref<2xi32, #tpu.memory_space<smem>>, %arg6: memref<128x64xf32, #tpu.memory_space<vmem>>, %arg7: memref<128x1xi32, #tpu.memory_space<vmem>>, %arg8: memref<1x64x32xf32, #tpu.memory_space<vmem>>, %arg9: memref<1x1x32xf32, #tpu.memory_space<vmem>>, %arg10: memref<1x32x32xf32, #tpu.memory_space<vmem>>, %arg11: memref<1x1x32xf32, #tpu.memory_space<vmem>>, %arg12: memref<1x32x1xf32, #tpu.memory_space<vmem>>, %arg13: memref<1x1x1xf32, #tpu.memory_space<vmem>>, %arg14: memref<1x1x128xf32, #tpu.memory_space<vmem>>) attributes {dimension_semantics = [#tpu.dimension_semantics<parallel>, #tpu.dimension_semantics<arbitrary>], iteration_bounds = array<i64: 2, 1>, scalar_prefetch = 4 : i64, scratch_operands = 0 : i64, tpu.core_type = #tpu.core_type<tc>, window_params = [{transform_indices = @transform_0, window_bounds = array<i64: 128, 64>}, {transform_indices = @transform_1, window_bounds = array<i64: 128, 1>}, {transform_indices = @transform_2, window_bounds = array<i64: 1, 64, 32>}, {transform_indices = @transform_3, window_bounds = array<i64: 1, 1, 32>}, {transform_indices = @transform_4, window_bounds = array<i64: 1, 32, 32>}, {transform_indices = @transform_5, window_bounds = array<i64: 1, 1, 32>}, {transform_indices = @transform_6, window_bounds = array<i64: 1, 32, 1>}, {transform_indices = @transform_7, window_bounds = array<i64: 1, 1, 1>}, {transform_indices = @transform_8, window_bounds = array<i64: 1, 1, 128>}]} {
    %c1_i32 = arith.constant 1 : i32
    %0 = arith.muli %arg0, %c1_i32 : i32
    %1 = arith.addi %0, %arg1 : i32
    %c0_i32 = arith.constant 0 : i32
    %2 = arith.cmpi eq, %arg1, %c0_i32 : i32
    %3 = arith.extui %2 : i1 to i32
    %c0_i32_0 = arith.constant 0 : i32
    %4 = arith.cmpi ne, %3, %c0_i32_0 : i32
    scf.if %4 {
      %cst = arith.constant 0.000000e+00 : f32
      %10 = vector.broadcast %cst : f32 to vector<1x128xf32>
      %c0 = arith.constant 0 : index
      %c0_3 = arith.constant 0 : index
      %c0_4 = arith.constant 0 : index
      %11 = vector.load %arg14[%c0, %c0_3, %c0_4] : memref<1x1x128xf32, #tpu.memory_space<vmem>>, vector<1x1x128xf32>
      %12 = vector.shape_cast %11 : vector<1x1x128xf32> to vector<1x128xf32>
      %13 = vector.shape_cast %10 : vector<1x128xf32> to vector<1x1x128xf32>
      tpu.vector_store %arg14[%c0, %c0_3, %c0_4], %13 {strides = array<i32>} : memref<1x1x128xf32, #tpu.memory_space<vmem>>, vector<1x1x128xf32>,
    } else {
    }
    %5 = arith.index_cast %1 : i32 to index
    %6 = memref.load %arg5[%5] : memref<2xi32, #tpu.memory_space<smem>>
    %c1_i32_1 = arith.constant 1 : i32
    %7 = arith.cmpi eq, %6, %c1_i32_1 : i32
    %8 = arith.extui %7 : i1 to i32
    %c0_i32_2 = arith.constant 0 : i32
    %9 = arith.cmpi ne, %8, %c0_i32_2 : i32
    scf.if %9 {
      %c0 = arith.constant 0 : index
      %c0_3 = arith.constant 0 : index
      %10 = vector.load %arg6[%c0, %c0_3] : memref<128x64xf32, #tpu.memory_space<vmem>>, vector<128x64xf32>
      %c0_4 = arith.constant 0 : index
      %c0_5 = arith.constant 0 : index
      %c0_6 = arith.constant 0 : index
      %11 = vector.load %arg8[%c0_4, %c0_5, %c0_6] : memref<1x64x32xf32, #tpu.memory_space<vmem>>, vector<1x64x32xf32>
      %12 = vector.shape_cast %11 : vector<1x64x32xf32> to vector<64x32xf32>
      %c0_7 = arith.constant 0 : index
      %c0_8 = arith.constant 0 : index
      %c0_9 = arith.constant 0 : index
      %13 = vector.load %arg9[%c0_7, %c0_8, %c0_9] : memref<1x1x32xf32, #tpu.memory_space<vmem>>, vector<1x1x32xf32>
      %14 = vector.shape_cast %13 : vector<1x1x32xf32> to vector<1x32xf32>
      %cst = arith.constant dense<0.000000e+00> : vector<128x32xf32>
      %15 = tpu.matmul %10, %12, %cst {dimension_numbers = #tpu.dot_dimension_numbers<[1], [0], [0], [1], [0, 0, 1, 1], [], []>} : vector<128x64xf32>, vector<64x32xf32>, vector<128x32xf32> -> vector<128x32xf32>
      %16 = vector.broadcast %14 : vector<1x32xf32> to vector<128x32xf32>
      %17 = arith.addf %15, %16 : vector<128x32xf32>
      %cst_10 = arith.constant 2.000000e+01 : f32
      %18 = vector.broadcast %cst_10 : f32 to vector<128x32xf32>
      %19 = arith.cmpf ogt, %17, %18 : vector<128x32xf32>
      %cst_11 = arith.constant 2.000000e+01 : f32
      %20 = vector.broadcast %cst_11 : f32 to vector<128x32xf32>
      %21 = arith.minimumf %17, %20 : vector<128x32xf32>
      %22 = math.exp %21 : vector<128x32xf32>
      %23 = math.log1p %22 : vector<128x32xf32>
      %24 = arith.select %19, %17, %23 : vector<128x32xi1>, vector<128x32xf32>
      %c0_12 = arith.constant 0 : index
      %c0_13 = arith.constant 0 : index
      %c0_14 = arith.constant 0 : index
      %25 = vector.load %arg10[%c0_12, %c0_13, %c0_14] : memref<1x32x32xf32, #tpu.memory_space<vmem>>, vector<1x32x32xf32>
      %26 = vector.shape_cast %25 : vector<1x32x32xf32> to vector<32x32xf32>
      %c0_15 = arith.constant 0 : index
      %c0_16 = arith.constant 0 : index
      %c0_17 = arith.constant 0 : index
      %27 = vector.load %arg11[%c0_15, %c0_16, %c0_17] : memref<1x1x32xf32, #tpu.memory_space<vmem>>, vector<1x1x32xf32>
      %28 = vector.shape_cast %27 : vector<1x1x32xf32> to vector<1x32xf32>
      %cst_18 = arith.constant dense<0.000000e+00> : vector<128x32xf32>
      %29 = tpu.matmul %24, %26, %cst_18 {dimension_numbers = #tpu.dot_dimension_numbers<[1], [0], [0], [1], [0, 0, 1, 1], [], []>} : vector<128x32xf32>, vector<32x32xf32>, vector<128x32xf32> -> vector<128x32xf32>
      %30 = vector.broadcast %28 : vector<1x32xf32> to vector<128x32xf32>
      %31 = arith.addf %29, %30 : vector<128x32xf32>
      %cst_19 = arith.constant 2.000000e+01 : f32
      %32 = vector.broadcast %cst_19 : f32 to vector<128x32xf32>
      %33 = arith.cmpf ogt, %31, %32 : vector<128x32xf32>
      %cst_20 = arith.constant 2.000000e+01 : f32
      %34 = vector.broadcast %cst_20 : f32 to vector<128x32xf32>
      %35 = arith.minimumf %31, %34 : vector<128x32xf32>
      %36 = math.exp %35 : vector<128x32xf32>
      %37 = math.log1p %36 : vector<128x32xf32>
      %38 = arith.select %33, %31, %37 : vector<128x32xi1>, vector<128x32xf32>
      %c0_21 = arith.constant 0 : index
      %c0_22 = arith.constant 0 : index
      %c0_23 = arith.constant 0 : index
      %39 = vector.load %arg12[%c0_21, %c0_22, %c0_23] : memref<1x32x1xf32, #tpu.memory_space<vmem>>, vector<1x32x1xf32>
      %40 = vector.shape_cast %39 : vector<1x32x1xf32> to vector<32x1xf32>
      %c0_24 = arith.constant 0 : index
      %c0_25 = arith.constant 0 : index
      %c0_26 = arith.constant 0 : index
      %41 = vector.load %arg13[%c0_24, %c0_25, %c0_26] : memref<1x1x1xf32, #tpu.memory_space<vmem>>, vector<1x1x1xf32>
      %42 = vector.shape_cast %41 : vector<1x1x1xf32> to vector<1x1xf32>
      %cst_27 = arith.constant dense<0.000000e+00> : vector<128x1xf32>
      %43 = tpu.matmul %38, %40, %cst_27 {dimension_numbers = #tpu.dot_dimension_numbers<[1], [0], [0], [1], [0, 0, 1, 1], [], []>} : vector<128x32xf32>, vector<32x1xf32>, vector<128x1xf32> -> vector<128x1xf32>
      %44 = vector.broadcast %42 : vector<1x1xf32> to vector<128x1xf32>
      %45 = arith.addf %43, %44 : vector<128x1xf32>
      %46 = arith.index_cast %1 : i32 to index
      %47 = memref.load %arg4[%46] : memref<2xi32, #tpu.memory_space<smem>>
      %48 = tpu.assume_multiple %47, 128 : i32
      %c0_28 = arith.constant 0 : index
      %c0_29 = arith.constant 0 : index
      %49 = vector.load %arg7[%c0_28, %c0_29] : memref<128x1xi32, #tpu.memory_space<vmem>>, vector<128x1xi32>
      %50 = vector.broadcast %48 : i32 to vector<128x1xi32>
      %51 = arith.subi %49, %50 : vector<128x1xi32>
      %52 = tpu.iota {dimensions = array<i32: 1>} : vector<128x128xi32>
      %53 = vector.broadcast %51 : vector<128x1xi32> to vector<128x128xi32>
      %54 = arith.cmpi eq, %53, %52 : vector<128x128xi32>
      %55 = arith.extui %54 : vector<128x128xi1> to vector<128x128xi32>
      %56 = arith.sitofp %55 : vector<128x128xi32> to vector<128x128xf32>
      %57 = arith.truncf %56 : vector<128x128xf32> to vector<128x128xbf16>
      %58 = arith.truncf %45 : vector<128x1xf32> to vector<128x1xbf16>
      %cst_30 = arith.constant dense<0.000000e+00> : vector<1x128xf32>
      %59 = tpu.matmul %58, %57, %cst_30 {dimension_numbers = #tpu.dot_dimension_numbers<[0], [0], [1], [1], [0, 1, 1, 1], [], []>} : vector<128x1xbf16>, vector<128x128xbf16>, vector<1x128xf32> -> vector<1x128xf32>
      %c0_31 = arith.constant 0 : index
      %c0_32 = arith.constant 0 : index
      %c0_33 = arith.constant 0 : index
      %60 = vector.load %arg14[%c0_31, %c0_32, %c0_33] : memref<1x1x128xf32, #tpu.memory_space<vmem>>, vector<1x1x128xf32>
      %61 = vector.shape_cast %60 : vector<1x1x128xf32> to vector<1x128xf32>
      %62 = arith.addf %61, %59 : vector<1x128xf32>
      %c0_34 = arith.constant 0 : index
      %c0_35 = arith.constant 0 : index
      %c0_36 = arith.constant 0 : index
      %63 = vector.load %arg14[%c0_34, %c0_35, %c0_36] : memref<1x1x128xf32, #tpu.memory_space<vmem>>, vector<1x1x128xf32>
      %64 = vector.shape_cast %63 : vector<1x1x128xf32> to vector<1x128xf32>
      %65 = vector.shape_cast %62 : vector<1x128xf32> to vector<1x1x128xf32>
      tpu.vector_store %arg14[%c0_34, %c0_35, %c0_36], %65 {strides = array<i32>} : memref<1x1x128xf32, #tpu.memory_space<vmem>>, vector<1x1x128xf32>,
    } else {
    }
    return
  }
  func.func @transform_0(%arg0: i32, %arg1: i32, %arg2: memref<2xi32, #tpu.memory_space<smem>>, %arg3: memref<2xi32, #tpu.memory_space<smem>>, %arg4: memref<2xi32, #tpu.memory_space<smem>>, %arg5: memref<2xi32, #tpu.memory_space<smem>>) -> (i32, i32) {
    %c1_i32 = arith.constant 1 : i32
    %0 = arith.muli %arg0, %c1_i32 : i32
    %1 = arith.addi %0, %arg1 : i32
    %2 = arith.index_cast %1 : i32 to index
    %3 = memref.load %arg3[%2] : memref<2xi32, #tpu.memory_space<smem>>
    %c0_i32 = arith.constant 0 : i32
    %c0_i32_0 = arith.constant 0 : i32
    return %3, %c0_i32 : i32, i32
  }
  func.func @transform_1(%arg0: i32, %arg1: i32, %arg2: memref<2xi32, #tpu.memory_space<smem>>, %arg3: memref<2xi32, #tpu.memory_space<smem>>, %arg4: memref<2xi32, #tpu.memory_space<smem>>, %arg5: memref<2xi32, #tpu.memory_space<smem>>) -> (i32, i32) {
    %c1_i32 = arith.constant 1 : i32
    %0 = arith.muli %arg0, %c1_i32 : i32
    %1 = arith.addi %0, %arg1 : i32
    %2 = arith.index_cast %1 : i32 to index
    %3 = memref.load %arg3[%2] : memref<2xi32, #tpu.memory_space<smem>>
    %c0_i32 = arith.constant 0 : i32
    %c0_i32_0 = arith.constant 0 : i32
    return %3, %c0_i32 : i32, i32
  }
  func.func @transform_2(%arg0: i32, %arg1: i32, %arg2: memref<2xi32, #tpu.memory_space<smem>>, %arg3: memref<2xi32, #tpu.memory_space<smem>>, %arg4: memref<2xi32, #tpu.memory_space<smem>>, %arg5: memref<2xi32, #tpu.memory_space<smem>>) -> (i32, i32, i32) {
    %c1_i32 = arith.constant 1 : i32
    %0 = arith.muli %arg0, %c1_i32 : i32
    %1 = arith.addi %0, %arg1 : i32
    %2 = arith.index_cast %1 : i32 to index
    %3 = memref.load %arg2[%2] : memref<2xi32, #tpu.memory_space<smem>>
    %c0_i32 = arith.constant 0 : i32
    %c0_i32_0 = arith.constant 0 : i32
    %c0_i32_1 = arith.constant 0 : i32
    return %3, %c0_i32, %c0_i32_0 : i32, i32, i32
  }
  func.func @transform_3(%arg0: i32, %arg1: i32, %arg2: memref<2xi32, #tpu.memory_space<smem>>, %arg3: memref<2xi32, #tpu.memory_space<smem>>, %arg4: memref<2xi32, #tpu.memory_space<smem>>, %arg5: memref<2xi32, #tpu.memory_space<smem>>) -> (i32, i32, i32) {
    %c1_i32 = arith.constant 1 : i32
    %0 = arith.muli %arg0, %c1_i32 : i32
    %1 = arith.addi %0, %arg1 : i32
    %2 = arith.index_cast %1 : i32 to index
    %3 = memref.load %arg2[%2] : memref<2xi32, #tpu.memory_space<smem>>
    %c0_i32 = arith.constant 0 : i32
    %c0_i32_0 = arith.constant 0 : i32
    %c0_i32_1 = arith.constant 0 : i32
    return %3, %c0_i32, %c0_i32_0 : i32, i32, i32
  }
  func.func @transform_4(%arg0: i32, %arg1: i32, %arg2: memref<2xi32, #tpu.memory_space<smem>>, %arg3: memref<2xi32, #tpu.memory_space<smem>>, %arg4: memref<2xi32, #tpu.memory_space<smem>>, %arg5: memref<2xi32, #tpu.memory_space<smem>>) -> (i32, i32, i32) {
    %c1_i32 = arith.constant 1 : i32
    %0 = arith.muli %arg0, %c1_i32 : i32
    %1 = arith.addi %0, %arg1 : i32
    %2 = arith.index_cast %1 : i32 to index
    %3 = memref.load %arg2[%2] : memref<2xi32, #tpu.memory_space<smem>>
    %c0_i32 = arith.constant 0 : i32
    %c0_i32_0 = arith.constant 0 : i32
    %c0_i32_1 = arith.constant 0 : i32
    return %3, %c0_i32, %c0_i32_0 : i32, i32, i32
  }
  func.func @transform_5(%arg0: i32, %arg1: i32, %arg2: memref<2xi32, #tpu.memory_space<smem>>, %arg3: memref<2xi32, #tpu.memory_space<smem>>, %arg4: memref<2xi32, #tpu.memory_space<smem>>, %arg5: memref<2xi32, #tpu.memory_space<smem>>) -> (i32, i32, i32) {
    %c1_i32 = arith.constant 1 : i32
    %0 = arith.muli %arg0, %c1_i32 : i32
    %1 = arith.addi %0, %arg1 : i32
    %2 = arith.index_cast %1 : i32 to index
    %3 = memref.load %arg2[%2] : memref<2xi32, #tpu.memory_space<smem>>
    %c0_i32 = arith.constant 0 : i32
    %c0_i32_0 = arith.constant 0 : i32
    %c0_i32_1 = arith.constant 0 : i32
    return %3, %c0_i32, %c0_i32_0 : i32, i32, i32
  }
  func.func @transform_6(%arg0: i32, %arg1: i32, %arg2: memref<2xi32, #tpu.memory_space<smem>>, %arg3: memref<2xi32, #tpu.memory_space<smem>>, %arg4: memref<2xi32, #tpu.memory_space<smem>>, %arg5: memref<2xi32, #tpu.memory_space<smem>>) -> (i32, i32, i32) {
    %c1_i32 = arith.constant 1 : i32
    %0 = arith.muli %arg0, %c1_i32 : i32
    %1 = arith.addi %0, %arg1 : i32
    %2 = arith.index_cast %1 : i32 to index
    %3 = memref.load %arg2[%2] : memref<2xi32, #tpu.memory_space<smem>>
    %c0_i32 = arith.constant 0 : i32
    %c0_i32_0 = arith.constant 0 : i32
    %c0_i32_1 = arith.constant 0 : i32
    return %3, %c0_i32, %c0_i32_0 : i32, i32, i32
  }
  func.func @transform_7(%arg0: i32, %arg1: i32, %arg2: memref<2xi32, #tpu.memory_space<smem>>, %arg3: memref<2xi32, #tpu.memory_space<smem>>, %arg4: memref<2xi32, #tpu.memory_space<smem>>, %arg5: memref<2xi32, #tpu.memory_space<smem>>) -> (i32, i32, i32) {
    %c1_i32 = arith.constant 1 : i32
    %0 = arith.muli %arg0, %c1_i32 : i32
    %1 = arith.addi %0, %arg1 : i32
    %2 = arith.index_cast %1 : i32 to index
    %3 = memref.load %arg2[%2] : memref<2xi32, #tpu.memory_space<smem>>
    %c0_i32 = arith.constant 0 : i32
    %c0_i32_0 = arith.constant 0 : i32
    %c0_i32_1 = arith.constant 0 : i32
    return %3, %c0_i32, %c0_i32_0 : i32, i32, i32
  }
  func.func @transform_8(%arg0: i32, %arg1: i32, %arg2: memref<2xi32, #tpu.memory_space<smem>>, %arg3: memref<2xi32, #tpu.memory_space<smem>>, %arg4: memref<2xi32, #tpu.memory_space<smem>>, %arg5: memref<2xi32, #tpu.memory_space<smem>>) -> (i32, i32, i32) {
    %c0_i32 = arith.constant 0 : i32
    %c0_i32_0 = arith.constant 0 : i32
    %c0_i32_1 = arith.constant 0 : i32
    return %arg0, %c0_i32, %c0_i32_0 : i32, i32, i32
  }
}

</mosaic_0001>

<llo_original>
// kernel: tpu_custom_call.1
$region0: #{tpu_custom_call.1}
  #allocation0 [shape = 'u32[]', space=smem, size = 0x4, offset = 0x4, fixed_abs, tag = 'smem constant byte address 0x4 - core index']
  #allocation1 [shape = 'u32[72,128]{1,0:T(1,128)}', space=vmem, size = 0x9000, scoped, tag = 'internal scratch']
  #allocation2 [shape = 's32[1]{0}', space=sflag, size = 0x4, scoped, tag = 'scoped memory for tpu_custom_call.1']
  #allocation3 [shape = 'u8[512]{0}', space=smem, size = 0x200, scoped, tag = 'prefetched SMEM operand 0']
  #allocation4 [shape = 'u8[512]{0}', space=smem, size = 0x200, scoped, tag = 'prefetched SMEM operand 1']
  #allocation5 [shape = 'u8[512]{0}', space=smem, size = 0x200, scoped, tag = 'prefetched SMEM operand 2']
  #allocation6 [shape = 'u8[512]{0}', space=smem, size = 0x200, scoped, tag = 'prefetched SMEM operand 3']
  %s0 = inlined_call_operand.vmem [shape: s32[2], index: 0, kind: input, shape index: {}]
  %s1 = inlined_call_operand.vmem [shape: s32[2], index: 1, kind: input, shape index: {}]
  %s2 = inlined_call_operand.vmem [shape: s32[2], index: 2, kind: input, shape index: {}]
  %s3 = inlined_call_operand.vmem [shape: s32[2], index: 3, kind: input, shape index: {}]
  %s4 = inlined_call_operand.vmem [shape: f32[256,64], index: 4, kind: input, shape index: {}]
  %s5 = inlined_call_operand.vmem [shape: s32[256,1], index: 5, kind: input, shape index: {}]
  %s6 = inlined_call_operand.vmem [shape: f32[2,64,32], index: 6, kind: input, shape index: {}]
  %s7 = inlined_call_operand.vmem [shape: f32[2,1,32], index: 7, kind: input, shape index: {}]
  %s8 = inlined_call_operand.vmem [shape: f32[2,32,32], index: 8, kind: input, shape index: {}]
  %s9 = inlined_call_operand.vmem [shape: f32[2,1,32], index: 9, kind: input, shape index: {}]
  %s10 = inlined_call_operand.vmem [shape: f32[2,32,1], index: 10, kind: input, shape index: {}]
  %s11 = inlined_call_operand.vmem [shape: f32[2,1,1], index: 11, kind: input, shape index: {}]
  %s12 = inlined_call_operand.hbm [shape: f32[2,1,128], index: 12, kind: output, shape index: {}]
  %s13 = sld [smem:[#allocation0]]
  $region73: #{tpu_custom_call.1} parent=0
    _
  %s15 = ssub.s32 1, %s13
  %s16 = scalar_select 0, %s15, %s13
  %s18 = sshll.u32 %s0, 4
  %s19 = int_to_ptr.vmem [resolvable:$true] %s18
  %21 = dma.vmem_to_smem %s19, 16, [#allocation3], [#allocation2]
  %s23 = sshll.u32 %s1, 4
  %s24 = int_to_ptr.vmem [resolvable:$true] %s23
  %26 = dma.vmem_to_smem %s24, 16, [#allocation4], [#allocation2]
  %s28 = sshll.u32 %s2, 4
  %s29 = int_to_ptr.vmem [resolvable:$true] %s28
  %31 = dma.vmem_to_smem %s29, 16, [#allocation5], [#allocation2]
  %s33 = sshll.u32 %s3, 4
  %s34 = int_to_ptr.vmem [resolvable:$true] %s33
  %36 = dma.vmem_to_smem %s34, 16, [#allocation6], [#allocation2]
  %38 = dma.done [#allocation2], 64
  %39 = sfence
  $region1: #{tpu_custom_call.1} parent=0
    #allocation7 [shape = 'u8[1024]{0}', space=vmem, size = 0x400, scoped, tag = 'output window, operand 0']
    #allocation8 [shape = 's32[2]{0}', space=sflag, size = 0x8, scoped, tag = 'scoped memory for tpu_custom_call.1']
    %40 = vsyncpa [#allocation8], 0
    %s41 = scalar_lea.sflag [#allocation8], 1
    %42 = vsyncpa %s41, 0
    loop: start=0, step=1, limit=4
    $region2: #{tpu_custom_call.1} parent=1 // loop_pre_header
      _
    $region3: #{tpu_custom_call.1} parent=1 // loop_header
      %s44 = sphi 0, %s48
      %p45 = scmp.ge.s32.totalorder %s44, 4
      %s51 = sphi 0, %s63
      %s52 = sphi 0, %s59
      %s53 = sphi 0, %s51
      %s54 = sphi 0, %s52
      %s55 = sphi 0, %s53
      %s56 = sphi 0, %s54
      %s70 = sphi 0, %s72
      %s73 = sphi 0, %s70
      %s74 = sphi 0, %s73
      %s90 = sphi 0, %s74
      %s100 = sphi 0, %s102
      %s103 = sphi 0, %s100
      %s104 = sphi 0, %s103
      %s120 = sphi 0, %s104
      %s130 = sphi 0, %s132
      %s133 = sphi 0, %s130
      %s134 = sphi 0, %s133
      %s150 = sphi 0, %s134
      %s160 = sphi 0, %s162
      %s163 = sphi 0, %s160
      %s164 = sphi 0, %s163
      %s180 = sphi 0, %s164
      %s190 = sphi 0, %s192
      %s193 = sphi 0, %s190
      %s194 = sphi 0, %s193
      %s210 = sphi 0, %s194
      %s220 = sphi 0, %s222
      %s223 = sphi 0, %s220
      %s224 = sphi 0, %s223
      %s240 = sphi 0, %s224
      %s250 = sphi 0, %s252
      %s253 = sphi 0, %s250
      %s254 = sphi 0, %s253
      %s270 = sphi 0, %s254
      %s280 = sphi 0, %s282
      %s283 = sphi 0, %s280
      %s284 = sphi 0, %s283
      %s300 = sphi 0, %s284
      %s306 = sphi 0, %s308
      %s309 = sphi 0, %s306
      %s310 = sphi 0, %s309
      %s326 = sphi 0, %s310
    $region4: #{tpu_custom_call.1} parent=1 // loop_header_branch
      %47 = sbr.rel (%p45) target = $region8
    $region5: #{tpu_custom_call.1} parent=1 // loop_body
      %s49 = ssub.s32 %s44, 1
      %s50 = ssub.s32 %s44, 2
      %s57 = sadd.s32 1, %s52
      %p58 = scmp.ge.s32.totalorder %s57, 1
      %s59 = scalar_select %p58, 0, %s57
      %s60 = sadd.s32 1, %s51
      %s61 = scalar_select %p58, %s60, %s51
      %p62 = scmp.ge.s32.totalorder %s61, 2
      %s63 = scalar_select %p62, 0, %s61
      %s64 = sadd.s32 %s51, %s52
      %s65 = sld [smem:[#allocation4 + %s64]]
      %s66 = sadd.s32 %s63, %s59
      %s67 = sld [smem:[#allocation4 + %s66]]
      %s68 = ssub.s32 %s65, %s67
      %p69 = scmp.eq.s32.totalorder %s68, 0
      %s71 = sadd.s32 %s70, 1
      %s72 = scalar_select %p69, %s70, %s71
      %p75 = pneg %p69
      %p76 = scmp.eq.s32.totalorder %s44, 1
      %p77 = por %p75, %p76
      %p78 = scmp.ne.s32.totalorder %s70, %s73
      %p79 = scmp.eq.s32.totalorder %s44, 0
      %p80 = por %p78, %p79
      %p81 = scmp.ne.s32.totalorder %s70, %s73
      %p82 = scmp.eq.s32.totalorder %s49, 1
      %p83 = por %p81, %p82
      %p84 = scmp.ne.s32.totalorder %s73, %s74
      %p85 = scmp.eq.s32.totalorder %s49, 0
      %p86 = por %p84, %p85
      %p87 = scmp.ne.s32.totalorder %s73, %s74
      %p88 = scmp.eq.s32.totalorder %s50, 1
      %p89 = por %p87, %p88
      %p91 = scmp.ne.s32.totalorder %s74, %s90
      %p92 = scmp.eq.s32.totalorder %s50, 0
      %p93 = por %p91, %p92
      %s94 = sadd.s32 %s51, %s52
      %s95 = sld [smem:[#allocation4 + %s94]]
      %s96 = sadd.s32 %s63, %s59
      %s97 = sld [smem:[#allocation4 + %s96]]
      %s98 = ssub.s32 %s95, %s97
      %p99 = scmp.eq.s32.totalorder %s98, 0
      %s101 = sadd.s32 %s100, 1
      %s102 = scalar_select %p99, %s100, %s101
      %p105 = pneg %p99
      %p106 = scmp.eq.s32.totalorder %s44, 1
      %p107 = por %p105, %p106
      %p108 = scmp.ne.s32.totalorder %s100, %s103
      %p109 = scmp.eq.s32.totalorder %s44, 0
      %p110 = por %p108, %p109
      %p111 = scmp.ne.s32.totalorder %s100, %s103
      %p112 = scmp.eq.s32.totalorder %s49, 1
      %p113 = por %p111, %p112
      %p114 = scmp.ne.s32.totalorder %s103, %s104
      %p115 = scmp.eq.s32.totalorder %s49, 0
      %p116 = por %p114, %p115
      %p117 = scmp.ne.s32.totalorder %s103, %s104
      %p118 = scmp.eq.s32.totalorder %s50, 1
      %p119 = por %p117, %p118
      %p121 = scmp.ne.s32.totalorder %s104, %s120
      %p122 = scmp.eq.s32.totalorder %s50, 0
      %p123 = por %p121, %p122
      %s124 = sadd.s32 %s51, %s52
      %s125 = sld [smem:[#allocation3 + %s124]]
      %s126 = sadd.s32 %s63, %s59
      %s127 = sld [smem:[#allocation3 + %s126]]
      %s128 = ssub.s32 %s125, %s127
      %p129 = scmp.eq.s32.totalorder %s128, 0
      %s131 = sadd.s32 %s130, 1
      %s132 = scalar_select %p129, %s130, %s131
      %p135 = pneg %p129
      %p136 = scmp.eq.s32.totalorder %s44, 1
      %p137 = por %p135, %p136
      %p138 = scmp.ne.s32.totalorder %s130, %s133
      %p139 = scmp.eq.s32.totalorder %s44, 0
      %p140 = por %p138, %p139
      %p141 = scmp.ne.s32.totalorder %s130, %s133
      %p142 = scmp.eq.s32.totalorder %s49, 1
      %p143 = por %p141, %p142
      %p144 = scmp.ne.s32.totalorder %s133, %s134
      %p145 = scmp.eq.s32.totalorder %s49, 0
      %p146 = por %p144, %p145
      %p147 = scmp.ne.s32.totalorder %s133, %s134
      %p148 = scmp.eq.s32.totalorder %s50, 1
      %p149 = por %p147, %p148
      %p151 = scmp.ne.s32.totalorder %s134, %s150
      %p152 = scmp.eq.s32.totalorder %s50, 0
      %p153 = por %p151, %p152
      %s154 = sadd.s32 %s51, %s52
      %s155 = sld [smem:[#allocation3 + %s154]]
      %s156 = sadd.s32 %s63, %s59
      %s157 = sld [smem:[#allocation3 + %s156]]
      %s158 = ssub.s32 %s155, %s157
      %p159 = scmp.eq.s32.totalorder %s158, 0
      %s161 = sadd.s32 %s160, 1
      %s162 = scalar_select %p159, %s160, %s161
      %p165 = pneg %p159
      %p166 = scmp.eq.s32.totalorder %s44, 1
      %p167 = por %p165, %p166
      %p168 = scmp.ne.s32.totalorder %s160, %s163
      %p169 = scmp.eq.s32.totalorder %s44, 0
      %p170 = por %p168, %p169
      %p171 = scmp.ne.s32.totalorder %s160, %s163
      %p172 = scmp.eq.s32.totalorder %s49, 1
      %p173 = por %p171, %p172
      %p174 = scmp.ne.s32.totalorder %s163, %s164
      %p175 = scmp.eq.s32.totalorder %s49, 0
      %p176 = por %p174, %p175
      %p177 = scmp.ne.s32.totalorder %s163, %s164
      %p178 = scmp.eq.s32.totalorder %s50, 1
      %p179 = por %p177, %p178
      %p181 = scmp.ne.s32.totalorder %s164, %s180
      %p182 = scmp.eq.s32.totalorder %s50, 0
      %p183 = por %p181, %p182
      %s184 = sadd.s32 %s51, %s52
      %s185 = sld [smem:[#allocation3 + %s184]]
      %s186 = sadd.s32 %s63, %s59
      %s187 = sld [smem:[#allocation3 + %s186]]
      %s188 = ssub.s32 %s185, %s187
      %p189 = scmp.eq.s32.totalorder %s188, 0
      %s191 = sadd.s32 %s190, 1
      %s192 = scalar_select %p189, %s190, %s191
      %p195 = pneg %p189
      %p196 = scmp.eq.s32.totalorder %s44, 1
      %p197 = por %p195, %p196
      %p198 = scmp.ne.s32.totalorder %s190, %s193
      %p199 = scmp.eq.s32.totalorder %s44, 0
      %p200 = por %p198, %p199
      %p201 = scmp.ne.s32.totalorder %s190, %s193
      %p202 = scmp.eq.s32.totalorder %s49, 1
      %p203 = por %p201, %p202
      %p204 = scmp.ne.s32.totalorder %s193, %s194
      %p205 = scmp.eq.s32.totalorder %s49, 0
      %p206 = por %p204, %p205
      %p207 = scmp.ne.s32.totalorder %s193, %s194
      %p208 = scmp.eq.s32.totalorder %s50, 1
      %p209 = por %p207, %p208
      %p211 = scmp.ne.s32.totalorder %s194, %s210
      %p212 = scmp.eq.s32.totalorder %s50, 0
      %p213 = por %p211, %p212
      %s214 = sadd.s32 %s51, %s52
      %s215 = sld [smem:[#allocation3 + %s214]]
      %s216 = sadd.s32 %s63, %s59
      %s217 = sld [smem:[#allocation3 + %s216]]
      %s218 = ssub.s32 %s215, %s217
      %p219 = scmp.eq.s32.totalorder %s218, 0
      %s221 = sadd.s32 %s220, 1
      %s222 = scalar_select %p219, %s220, %s221
      %p225 = pneg %p219
      %p226 = scmp.eq.s32.totalorder %s44, 1
      %p227 = por %p225, %p226
      %p228 = scmp.ne.s32.totalorder %s220, %s223
      %p229 = scmp.eq.s32.totalorder %s44, 0
      %p230 = por %p228, %p229
      %p231 = scmp.ne.s32.totalorder %s220, %s223
      %p232 = scmp.eq.s32.totalorder %s49, 1
      %p233 = por %p231, %p232
      %p234 = scmp.ne.s32.totalorder %s223, %s224
      %p235 = scmp.eq.s32.totalorder %s49, 0
      %p236 = por %p234, %p235
      %p237 = scmp.ne.s32.totalorder %s223, %s224
      %p238 = scmp.eq.s32.totalorder %s50, 1
      %p239 = por %p237, %p238
      %p241 = scmp.ne.s32.totalorder %s224, %s240
      %p242 = scmp.eq.s32.totalorder %s50, 0
      %p243 = por %p241, %p242
      %s244 = sadd.s32 %s51, %s52
      %s245 = sld [smem:[#allocation3 + %s244]]
      %s246 = sadd.s32 %s63, %s59
      %s247 = sld [smem:[#allocation3 + %s246]]
      %s248 = ssub.s32 %s245, %s247
      %p249 = scmp.eq.s32.totalorder %s248, 0
      %s251 = sadd.s32 %s250, 1
      %s252 = scalar_select %p249, %s250, %s251
      %p255 = pneg %p249
      %p256 = scmp.eq.s32.totalorder %s44, 1
      %p257 = por %p255, %p256
      %p258 = scmp.ne.s32.totalorder %s250, %s253
      %p259 = scmp.eq.s32.totalorder %s44, 0
      %p260 = por %p258, %p259
      %p261 = scmp.ne.s32.totalorder %s250, %s253
      %p262 = scmp.eq.s32.totalorder %s49, 1
      %p263 = por %p261, %p262
      %p264 = scmp.ne.s32.totalorder %s253, %s254
      %p265 = scmp.eq.s32.totalorder %s49, 0
      %p266 = por %p264, %p265
      %p267 = scmp.ne.s32.totalorder %s253, %s254
      %p268 = scmp.eq.s32.totalorder %s50, 1
      %p269 = por %p267, %p268
      %p271 = scmp.ne.s32.totalorder %s254, %s270
      %p272 = scmp.eq.s32.totalorder %s50, 0
      %p273 = por %p271, %p272
      %s274 = sadd.s32 %s51, %s52
      %s275 = sld [smem:[#allocation3 + %s274]]
      %s276 = sadd.s32 %s63, %s59
      %s277 = sld [smem:[#allocation3 + %s276]]
      %s278 = ssub.s32 %s275, %s277
      %p279 = scmp.eq.s32.totalorder %s278, 0
      %s281 = sadd.s32 %s280, 1
      %s282 = scalar_select %p279, %s280, %s281
      %p285 = pneg %p279
      %p286 = scmp.eq.s32.totalorder %s44, 1
      %p287 = por %p285, %p286
      %p288 = scmp.ne.s32.totalorder %s280, %s283
      %p289 = scmp.eq.s32.totalorder %s44, 0
      %p290 = por %p288, %p289
      %p291 = scmp.ne.s32.totalorder %s280, %s283
      %p292 = scmp.eq.s32.totalorder %s49, 1
      %p293 = por %p291, %p292
      %p294 = scmp.ne.s32.totalorder %s283, %s284
      %p295 = scmp.eq.s32.totalorder %s49, 0
      %p296 = por %p294, %p295
      %p297 = scmp.ne.s32.totalorder %s283, %s284
      %p298 = scmp.eq.s32.totalorder %s50, 1
      %p299 = por %p297, %p298
      %p301 = scmp.ne.s32.totalorder %s284, %s300
      %p302 = scmp.eq.s32.totalorder %s50, 0
      %p303 = por %p301, %p302
      %s304 = ssub.s32 %s51, %s63
      %p305 = scmp.eq.s32.totalorder %s304, 0
      %s307 = sadd.s32 %s306, 1
      %s308 = scalar_select %p305, %s306, %s307
      %p311 = pneg %p305
      %p312 = scmp.eq.s32.totalorder %s44, 1
      %p313 = por %p311, %p312
      %p314 = scmp.ne.s32.totalorder %s306, %s309
      %p315 = scmp.eq.s32.totalorder %s44, 0
      %p316 = por %p314, %p315
      %p317 = scmp.ne.s32.totalorder %s306, %s309
      %p318 = scmp.eq.s32.totalorder %s49, 1
      %p319 = por %p317, %p318
      %p320 = scmp.ne.s32.totalorder %s309, %s310
      %p321 = scmp.eq.s32.totalorder %s49, 0
      %p322 = por %p320, %p321
      %p323 = scmp.ne.s32.totalorder %s309, %s310
      %p324 = scmp.eq.s32.totalorder %s50, 1
      %p325 = por %p323, %p324
      %p327 = scmp.ne.s32.totalorder %s310, %s326
      %p328 = scmp.eq.s32.totalorder %s50, 0
      %p329 = por %p327, %p328
      %p330 = scmp.le.s32.totalorder 1, %s44
      %p331 = scmp.lt.s32.totalorder %s44, 3
      %p332 = pnand %p330, %p331
      %p333 = pneg %p332
      // Predicated region
      $region9: #{tpu_custom_call.1} parent=5 // pred_check
        _
      $region10: #{tpu_custom_call.1} parent=5 // pred_check_branch
        %335 = sbr.rel (%p332) target = $region12
      $region11: #{tpu_custom_call.1} parent=5 // pred_region
        %s336 = ssub.s32 %s44, 1
      $region12: #{tpu_custom_call.1} parent=5 // pred_fallthru
        _
      %p337 = scmp.lt.s32.totalorder %s44, 2
      // Predicated region
      $region13: #{tpu_custom_call.1} parent=5 // pred_check
        %p338 = pneg %p337
      $region14: #{tpu_custom_call.1} parent=5 // pred_check_branch
        %340 = sbr.rel (%p338) target = $region16
      $region15: #{tpu_custom_call.1} parent=5 // pred_region
        // Predicated region
        $region17: #{tpu_custom_call.1} parent=15 // pred_check
          %p341 = pneg %p80
        $region18: #{tpu_custom_call.1} parent=15 // pred_check_branch
          %343 = sbr.rel (%p341) target = $region20
        $region19: #{tpu_custom_call.1} parent=15 // pred_region
          %s344 = sadd.s32 %s51, %s52
          %s345 = sld [smem:[#allocation4 + %s344]]
          %s346 = smul.u32 16, %s345
          %p347 = scmp.lt.s32.totalorder %s346, 31
          %s348 = scalar_select %p347, %s346, 31
          %s349 = smul.addr %s348, 8
          %s350 = scalar_lea.vmem %s4, %s349
          %s351 = sadd.s32 %s51, %s52
          %s352 = sld [smem:[#allocation4 + %s351]]
          %s353 = smul.u32 16, %s352
        $region20: #{tpu_custom_call.1} parent=15 // pred_fallthru
          _
        // Predicated region
        $region21: #{tpu_custom_call.1} parent=15 // pred_check
          %p354 = pneg %p110
        $region22: #{tpu_custom_call.1} parent=15 // pred_check_branch
          %356 = sbr.rel (%p354) target = $region24
        $region23: #{tpu_custom_call.1} parent=15 // pred_region
          %s357 = sadd.s32 %s51, %s52
          %s358 = sld [smem:[#allocation4 + %s357]]
          %s359 = smul.u32 16, %s358
          %p360 = scmp.lt.s32.totalorder %s359, 31
          %s361 = scalar_select %p360, %s359, 31
          %s362 = smul.addr %s361, 8
          %s363 = scalar_lea.vmem %s5, %s362
          %s364 = sadd.s32 %s51, %s52
          %s365 = sld [smem:[#allocation4 + %s364]]
          %s366 = smul.u32 16, %s365
        $region24: #{tpu_custom_call.1} parent=15 // pred_fallthru
          _
        // Predicated region
        $region25: #{tpu_custom_call.1} parent=15 // pred_check
          %p367 = pneg %p140
        $region26: #{tpu_custom_call.1} parent=15 // pred_check_branch
          %369 = sbr.rel (%p367) target = $region28
        $region27: #{tpu_custom_call.1} parent=15 // pred_region
          %s370 = sadd.s32 %s51, %s52
          %s371 = sld [smem:[#allocation3 + %s370]]
          %p372 = scmp.lt.s32.totalorder %s371, 1
          %s373 = scalar_select %p372, %s371, 1
          %s374 = smul.addr %s373, 8
          %s375 = smul.addr %s374, 8
          %s376 = scalar_lea.vmem %s6, %s375
          %s377 = sadd.s32 %s51, %s52
          %s378 = sld [smem:[#allocation3 + %s377]]
        $region28: #{tpu_custom_call.1} parent=15 // pred_fallthru
          _
        // Predicated region
        $region29: #{tpu_custom_call.1} parent=15 // pred_check
          %p379 = pneg %p170
        $region30: #{tpu_custom_call.1} parent=15 // pred_check_branch
          %381 = sbr.rel (%p379) target = $region32
        $region31: #{tpu_custom_call.1} parent=15 // pred_region
          %s382 = sadd.s32 %s51, %s52
          %s383 = sld [smem:[#allocation3 + %s382]]
          %p384 = scmp.lt.s32.totalorder %s383, 1
          %s385 = scalar_select %p384, %s383, 1
          %s386 = scalar_lea.vmem %s7, %s385
          %s387 = sadd.s32 %s51, %s52
          %s388 = sld [smem:[#allocation3 + %s387]]
        $region32: #{tpu_custom_call.1} parent=15 // pred_fallthru
          _
        // Predicated region
        $region33: #{tpu_custom_call.1} parent=15 // pred_check
          %p389 = pneg %p200
        $region34: #{tpu_custom_call.1} parent=15 // pred_check_branch
          %391 = sbr.rel (%p389) target = $region36
        $region35: #{tpu_custom_call.1} parent=15 // pred_region
          %s392 = sadd.s32 %s51, %s52
          %s393 = sld [smem:[#allocation3 + %s392]]
          %p394 = scmp.lt.s32.totalorder %s393, 1
          %s395 = scalar_select %p394, %s393, 1
          %s396 = smul.addr %s395, 4
          %s397 = smul.addr %s396, 8
          %s398 = scalar_lea.vmem %s8, %s397
          %s399 = sadd.s32 %s51, %s52
          %s400 = sld [smem:[#allocation3 + %s399]]
        $region36: #{tpu_custom_call.1} parent=15 // pred_fallthru
          _
        // Predicated region
        $region37: #{tpu_custom_call.1} parent=15 // pred_check
          %p401 = pneg %p230
        $region38: #{tpu_custom_call.1} parent=15 // pred_check_branch
          %403 = sbr.rel (%p401) target = $region40
        $region39: #{tpu_custom_call.1} parent=15 // pred_region
          %s404 = sadd.s32 %s51, %s52
          %s405 = sld [smem:[#allocation3 + %s404]]
          %p406 = scmp.lt.s32.totalorder %s405, 1
          %s407 = scalar_select %p406, %s405, 1
          %s408 = scalar_lea.vmem %s9, %s407
          %s409 = sadd.s32 %s51, %s52
          %s410 = sld [smem:[#allocation3 + %s409]]
        $region40: #{tpu_custom_call.1} parent=15 // pred_fallthru
          _
        // Predicated region
        $region41: #{tpu_custom_call.1} parent=15 // pred_check
          %p411 = pneg %p260
        $region42: #{tpu_custom_call.1} parent=15 // pred_check_branch
          %413 = sbr.rel (%p411) target = $region44
        $region43: #{tpu_custom_call.1} parent=15 // pred_region
          %s414 = sadd.s32 %s51, %s52
          %s415 = sld [smem:[#allocation3 + %s414]]
          %p416 = scmp.lt.s32.totalorder %s415, 1
          %s417 = scalar_select %p416, %s415, 1
          %s418 = smul.addr %s417, 4
          %s419 = smul.addr %s418, 8
          %s420 = scalar_lea.vmem %s10, %s419
          %s421 = sadd.s32 %s51, %s52
          %s422 = sld [smem:[#allocation3 + %s421]]
        $region44: #{tpu_custom_call.1} parent=15 // pred_fallthru
          _
        // Predicated region
        $region45: #{tpu_custom_call.1} parent=15 // pred_check
          %p423 = pneg %p290
        $region46: #{tpu_custom_call.1} parent=15 // pred_check_branch
          %425 = sbr.rel (%p423) target = $region48
        $region47: #{tpu_custom_call.1} parent=15 // pred_region
          %s426 = sadd.s32 %s51, %s52
          %s427 = sld [smem:[#allocation3 + %s426]]
          %p428 = scmp.lt.s32.totalorder %s427, 1
          %s429 = scalar_select %p428, %s427, 1
          %s430 = scalar_lea.vmem %s11, %s429
          %s431 = sadd.s32 %s51, %s52
          %s432 = sld [smem:[#allocation3 + %s431]]
        $region48: #{tpu_custom_call.1} parent=15 // pred_fallthru
          _
      $region16: #{tpu_custom_call.1} parent=5 // pred_fallthru
        _
      %p433 = scmp.le.s32.totalorder 1, %s44
      %p434 = scmp.lt.s32.totalorder %s44, 3
      %p435 = pnand %p433, %p434
      %p436 = pneg %p435
      // Predicated region
      $region49: #{tpu_custom_call.1} parent=5 // pred_check
        _
      $region50: #{tpu_custom_call.1} parent=5 // pred_check_branch
        %438 = sbr.rel (%p435) target = $region52
      $region51: #{tpu_custom_call.1} parent=5 // pred_region
        %s439 = ssub.s32 %s44, 1
        %s440 = sadd.s32 %s53, %s54
        %s441 = sld [smem:[#allocation4 + %s440]]
        %s442 = smul.u32 16, %s441
        %p443 = scmp.lt.s32.totalorder %s442, 31
        %s444 = scalar_select %p443, %s442, 31
        %s445 = smul.addr %s444, 8
        %s446 = scalar_lea.vmem %s4, %s445
        %p447 = pneg %p86
        %p448 = pneg %p83
        %s449 = sadd.s32 %s53, %s54
        %s450 = sld [smem:[#allocation4 + %s449]]
        %s451 = smul.u32 16, %s450
        %p452 = scmp.lt.s32.totalorder %s451, 31
        %s453 = scalar_select %p452, %s451, 31
        %s454 = smul.addr %s453, 8
        %s455 = scalar_lea.vmem %s5, %s454
        %p456 = pneg %p116
        %p457 = pneg %p113
        %s458 = sadd.s32 %s53, %s54
        %s459 = sld [smem:[#allocation3 + %s458]]
        %p460 = scmp.lt.s32.totalorder %s459, 1
        %s461 = scalar_select %p460, %s459, 1
        %s462 = smul.addr %s461, 8
        %s463 = smul.addr %s462, 8
        %s464 = scalar_lea.vmem %s6, %s463
        %p465 = pneg %p146
        %p466 = pneg %p143
        %s467 = sadd.s32 %s53, %s54
        %s468 = sld [smem:[#allocation3 + %s467]]
        %p469 = scmp.lt.s32.totalorder %s468, 1
        %s470 = scalar_select %p469, %s468, 1
        %s471 = scalar_lea.vmem %s7, %s470
        %p472 = pneg %p176
        %p473 = pneg %p173
        %s474 = sadd.s32 %s53, %s54
        %s475 = sld [smem:[#allocation3 + %s474]]
        %p476 = scmp.lt.s32.totalorder %s475, 1
        %s477 = scalar_select %p476, %s475, 1
        %s478 = smul.addr %s477, 4
        %s479 = smul.addr %s478, 8
        %s480 = scalar_lea.vmem %s8, %s479
        %p481 = pneg %p206
        %p482 = pneg %p203
        %s483 = sadd.s32 %s53, %s54
        %s484 = sld [smem:[#allocation3 + %s483]]
        %p485 = scmp.lt.s32.totalorder %s484, 1
        %s486 = scalar_select %p485, %s484, 1
        %s487 = scalar_lea.vmem %s9, %s486
        %p488 = pneg %p236
        %p489 = pneg %p233
        %s490 = sadd.s32 %s53, %s54
        %s491 = sld [smem:[#allocation3 + %s490]]
        %p492 = scmp.lt.s32.totalorder %s491, 1
        %s493 = scalar_select %p492, %s491, 1
        %s494 = smul.addr %s493, 4
        %s495 = smul.addr %s494, 8
        %s496 = scalar_lea.vmem %s10, %s495
        %p497 = pneg %p266
        %p498 = pneg %p263
        %s499 = sadd.s32 %s53, %s54
        %s500 = sld [smem:[#allocation3 + %s499]]
        %p501 = scmp.lt.s32.totalorder %s500, 1
        %s502 = scalar_select %p501, %s500, 1
        %s503 = scalar_lea.vmem %s11, %s502
        %p504 = pneg %p296
        %p505 = pneg %p293
        %p506 = pneg %p322
        %p507 = pneg %p319
        %s508 = sand.u32 %s309, 1
        %s509 = scalar_lea.sflag [#allocation8], %s508
        %s510 = sand.u32 %s309, 1
        %s511 = scalar_lea.vmem [#allocation7], %s510
        %s512 = sadd.s32 %s53, %s54
        %s513 = sld [smem:[#allocation4 + %s512]]
        %s514 = smul.u32 16, %s513
        %p515 = scmp.lt.s32.totalorder %s514, 31
        %s516 = scalar_select %p515, %s514, 31
        %s517 = smul.addr %s516, 8
        %s518 = scalar_lea.vmem %s4, %s517
        %s519 = sadd.s32 %s53, %s54
        %s520 = sld [smem:[#allocation4 + %s519]]
        %s521 = smul.u32 16, %s520
        %s522 = sadd.s32 %s53, %s54
        %s523 = sld [smem:[#allocation4 + %s522]]
        %s524 = smul.u32 16, %s523
        %p525 = scmp.lt.s32.totalorder %s524, 31
        %s526 = scalar_select %p525, %s524, 31
        %s527 = smul.addr %s526, 8
        %s528 = scalar_lea.vmem %s5, %s527
        %s529 = sadd.s32 %s53, %s54
        %s530 = sld [smem:[#allocation4 + %s529]]
        %s531 = smul.u32 16, %s530
        %s532 = sadd.s32 %s53, %s54
        %s533 = sld [smem:[#allocation3 + %s532]]
        %p534 = scmp.lt.s32.totalorder %s533, 1
        %s535 = scalar_select %p534, %s533, 1
        %s536 = smul.addr %s535, 8
        %s537 = smul.addr %s536, 8
        %s538 = scalar_lea.vmem %s6, %s537
        %s539 = sadd.s32 %s53, %s54
        %s540 = sld [smem:[#allocation3 + %s539]]
        %s541 = sadd.s32 %s53, %s54
        %s542 = sld [smem:[#allocation3 + %s541]]
        %p543 = scmp.lt.s32.totalorder %s542, 1
        %s544 = scalar_select %p543, %s542, 1
        %s545 = scalar_lea.vmem %s7, %s544
        %s546 = sadd.s32 %s53, %s54
        %s547 = sld [smem:[#allocation3 + %s546]]
        %s548 = sadd.s32 %s53, %s54
        %s549 = sld [smem:[#allocation3 + %s548]]
        %p550 = scmp.lt.s32.totalorder %s549, 1
        %s551 = scalar_select %p550, %s549, 1
        %s552 = smul.addr %s551, 4
        %s553 = smul.addr %s552, 8
        %s554 = scalar_lea.vmem %s8, %s553
        %s555 = sadd.s32 %s53, %s54
        %s556 = sld [smem:[#allocation3 + %s555]]
        %s557 = sadd.s32 %s53, %s54
        %s558 = sld [smem:[#allocation3 + %s557]]
        %p559 = scmp.lt.s32.totalorder %s558, 1
        %s560 = scalar_select %p559, %s558, 1
        %s561 = scalar_lea.vmem %s9, %s560
        %s562 = sadd.s32 %s53, %s54
        %s563 = sld [smem:[#allocation3 + %s562]]
        %s564 = sadd.s32 %s53, %s54
        %s565 = sld [smem:[#allocation3 + %s564]]
        %p566 = scmp.lt.s32.totalorder %s565, 1
        %s567 = scalar_select %p566, %s565, 1
        %s568 = smul.addr %s567, 4
        %s569 = smul.addr %s568, 8
        %s570 = scalar_lea.vmem %s10, %s569
        %s571 = sadd.s32 %s53, %s54
        %s572 = sld [smem:[#allocation3 + %s571]]
        %s573 = sadd.s32 %s53, %s54
        %s574 = sld [smem:[#allocation3 + %s573]]
        %p575 = scmp.lt.s32.totalorder %s574, 1
        %s576 = scalar_select %p575, %s574, 1
        %s577 = scalar_lea.vmem %s11, %s576
        %s578 = sadd.s32 %s53, %s54
        %s579 = sld [smem:[#allocation3 + %s578]]
        %s580 = sadd.s32 %s53, %s54
        %p581 = scmp.eq.s32.totalorder %s54, 0
        // Predicated region
        $region53: #{tpu_custom_call.1} parent=51 // pred_check
          %p582 = pneg %p581
        $region54: #{tpu_custom_call.1} parent=51 // pred_check_branch
          %584 = sbr.rel (%p582) target = $region56
        $region55: #{tpu_custom_call.1} parent=51 // pred_region
          %585 = vst [vmem:[%s511] sm:$0x1] 0.0
        $region56: #{tpu_custom_call.1} parent=51 // pred_fallthru
          _
        %s586 = sld [smem:[#allocation6 + %s580]]
        %p587 = scmp.eq.s32.totalorder %s586, 1
        // Predicated region
        $region57: #{tpu_custom_call.1} parent=51 // pred_check
          %p588 = pneg %p587
        $region58: #{tpu_custom_call.1} parent=51 // pred_check_branch
          %590 = sbr.rel (%p588) target = $region60
        $region59: #{tpu_custom_call.1} parent=51 // pred_region
          %v591 = vld [vmem:[%s518] sm:$0xff]
          %v592 = vld [vmem:[%s518 + $0x8] sm:$0xff]
          %v593 = vld [vmem:[%s518 + $0x10] sm:$0xff]
          %v594 = vld [vmem:[%s518 + $0x18] sm:$0xff]
          %v595 = vld [vmem:[%s518 + $0x20] sm:$0xff]
          %v596 = vld [vmem:[%s518 + $0x28] sm:$0xff]
          %v597 = vld [vmem:[%s518 + $0x30] sm:$0xff]
          %v598 = vld [vmem:[%s518 + $0x38] sm:$0xff]
          %v599 = vld [vmem:[%s518 + $0x40] sm:$0xff]
          %v600 = vld [vmem:[%s518 + $0x48] sm:$0xff]
          %v601 = vld [vmem:[%s518 + $0x50] sm:$0xff]
          %v602 = vld [vmem:[%s518 + $0x58] sm:$0xff]
          %v603 = vld [vmem:[%s518 + $0x60] sm:$0xff]
          %v604 = vld [vmem:[%s518 + $0x68] sm:$0xff]
          %v605 = vld [vmem:[%s518 + $0x70] sm:$0xff]
          %v606 = vld [vmem:[%s518 + $0x78] sm:$0xff]
          %v607 = vld [vmem:[%s538] sm:$0xff]
          %v608 = vld [vmem:[%s538 + $0x8] sm:$0xff]
          %v609 = vld [vmem:[%s538 + $0x10] sm:$0xff]
          %v610 = vld [vmem:[%s538 + $0x18] sm:$0xff]
          %v611 = vld [vmem:[%s538 + $0x20] sm:$0xff]
          %v612 = vld [vmem:[%s538 + $0x28] sm:$0xff]
          %v613 = vld [vmem:[%s538 + $0x30] sm:$0xff]
          %v614 = vld [vmem:[%s538 + $0x38] sm:$0xff]
          %v615 = vld [vmem:[%s545] sm:$0x1]
          %v617 = vperm.slane %v615, 0
          %vm619 = vcmask 523264
          %v621 = vsel %vm619, %v591, 0
          %v624 = vsel %vm619, %v592, 0
          %v627 = vsel %vm619, %v593, 0
          %v630 = vsel %vm619, %v594, 0
          %v633 = vsel %vm619, %v595, 0
          %v636 = vsel %vm619, %v596, 0
          %v639 = vsel %vm619, %v597, 0
          %v642 = vsel %vm619, %v598, 0
          %v645 = vsel %vm619, %v599, 0
          %v648 = vsel %vm619, %v600, 0
          %v651 = vsel %vm619, %v601, 0
          %v654 = vsel %vm619, %v602, 0
          %v657 = vsel %vm619, %v603, 0
          %v660 = vsel %vm619, %v604, 0
          %v663 = vsel %vm619, %v605, 0
          %v666 = vsel %vm619, %v606, 0
          %668 = vmatpush.msra.mxu0 0.0
          %669 = vmatpush.msra.mxu0 0.0
          %670 = vmatpush.msra.mxu0 0.0
          %671 = vmatpush.msra.mxu0 0.0
          %672 = vmatpush.msra.mxu0 0.0
          %673 = vmatpush.msra.mxu0 0.0
          %674 = vmatpush.msra.mxu0 0.0
          %675 = vmatpush.msra.mxu0 0.0
          %676 = vmatpush.msra.mxu0 %v614
          %677 = vmatpush.msra.mxu0 %v613
          %678 = vmatpush.msra.mxu0 %v612
          %679 = vmatpush.msra.mxu0 %v611
          %680 = vmatpush.msra.mxu0 %v610
          %681 = vmatpush.msra.mxu0 %v609
          %682 = vmatpush.msra.mxu0 %v608
          %683 = vmatpush.msra.mxu0 %v607
          %684 = vmatmul.f32.gmra.mxu0 %v621
          %v685 = vpop.f32.mrf.mxu0
          %v686 = vadd.f32 %v617, %v685
          %687 = vmatmul.f32.gmra.mxu0 %v624
          %v688 = vpop.f32.mrf.mxu0
          %v689 = vadd.f32 %v617, %v688
          %690 = vmatmul.f32.gmra.mxu0 %v627
          %v691 = vpop.f32.mrf.mxu0
          %v692 = vadd.f32 %v617, %v691
          %693 = vmatmul.f32.gmra.mxu0 %v630
          %v694 = vpop.f32.mrf.mxu0
          %v695 = vadd.f32 %v617, %v694
          %696 = vmatmul.f32.gmra.mxu0 %v633
          %v697 = vpop.f32.mrf.mxu0
          %v698 = vadd.f32 %v617, %v697
          %699 = vmatmul.f32.gmra.mxu0 %v636
          %v700 = vpop.f32.mrf.mxu0
          %v701 = vadd.f32 %v617, %v700
          %702 = vmatmul.f32.gmra.mxu0 %v639
          %v703 = vpop.f32.mrf.mxu0
          %v704 = vadd.f32 %v617, %v703
          %705 = vmatmul.f32.gmra.mxu0 %v642
          %v706 = vpop.f32.mrf.mxu0
          %v707 = vadd.f32 %v617, %v706
          %708 = vmatmul.f32.gmra.mxu0 %v645
          %v709 = vpop.f32.mrf.mxu0
          %v710 = vadd.f32 %v617, %v709
          %711 = vmatmul.f32.gmra.mxu0 %v648
          %v712 = vpop.f32.mrf.mxu0
          %v713 = vadd.f32 %v617, %v712
          %714 = vmatmul.f32.gmra.mxu0 %v651
          %v715 = vpop.f32.mrf.mxu0
          %v716 = vadd.f32 %v617, %v715
          %717 = vmatmul.f32.gmra.mxu0 %v654
          %v718 = vpop.f32.mrf.mxu0
          %v719 = vadd.f32 %v617, %v718
          %720 = vmatmul.f32.gmra.mxu0 %v657
          %v721 = vpop.f32.mrf.mxu0
          %v722 = vadd.f32 %v617, %v721
          %723 = vmatmul.f32.gmra.mxu0 %v660
          %v724 = vpop.f32.mrf.mxu0
          %v725 = vadd.f32 %v617, %v724
          %726 = vmatmul.f32.gmra.mxu0 %v663
          %v727 = vpop.f32.mrf.mxu0
          %v728 = vadd.f32 %v617, %v727
          %729 = vmatmul.f32.gmra.mxu0 %v666
          %v730 = vpop.f32.mrf.mxu0
          %v731 = vadd.f32 %v617, %v730
          %732 = vdwg.mxu0
          %vm733 = vcmp.gt.f32.partialorder %v686, 20.0
          %vm734 = vcmp.gt.f32.partialorder %v689, 20.0
          %vm735 = vcmp.gt.f32.partialorder %v692, 20.0
          %vm736 = vcmp.gt.f32.partialorder %v695, 20.0
          %vm737 = vcmp.gt.f32.partialorder %v698, 20.0
          %vm738 = vcmp.gt.f32.partialorder %v701, 20.0
          %vm739 = vcmp.gt.f32.partialorder %v704, 20.0
          %vm740 = vcmp.gt.f32.partialorder %v707, 20.0
          %vm741 = vcmp.gt.f32.partialorder %v710, 20.0
          %vm742 = vcmp.gt.f32.partialorder %v713, 20.0
          %vm743 = vcmp.gt.f32.partialorder %v716, 20.0
          %vm744 = vcmp.gt.f32.partialorder %v719, 20.0
          %vm745 = vcmp.gt.f32.partialorder %v722, 20.0
          %vm746 = vcmp.gt.f32.partialorder %v725, 20.0
          %vm747 = vcmp.gt.f32.partialorder %v728, 20.0
          %vm748 = vcmp.gt.f32.partialorder %v731, 20.0
          %v749 = vmin.f32 %v686, 20.0
          %v750 = vmin.f32 %v689, 20.0
          %v751 = vmin.f32 %v692, 20.0
          %v752 = vmin.f32 %v695, 20.0
          %v753 = vmin.f32 %v698, 20.0
          %v754 = vmin.f32 %v701, 20.0
          %v755 = vmin.f32 %v704, 20.0
          %v756 = vmin.f32 %v707, 20.0
          %v757 = vmin.f32 %v710, 20.0
          %v758 = vmin.f32 %v713, 20.0
          %v759 = vmin.f32 %v716, 20.0
          %v760 = vmin.f32 %v719, 20.0
          %v761 = vmin.f32 %v722, 20.0
          %v762 = vmin.f32 %v725, 20.0
          %v763 = vmin.f32 %v728, 20.0
          %v764 = vmin.f32 %v731, 20.0
          %v765 = vmul.f32 %v749, 1.442695
          %v766 = vpow.pop %v765
          %v767 = vmul.f32 %v750, 1.442695
          %v768 = vpow.pop %v767
          %v769 = vmul.f32 %v751, 1.442695
          %v770 = vpow.pop %v769
          %v771 = vmul.f32 %v752, 1.442695
          %v772 = vpow.pop %v771
          %v773 = vmul.f32 %v753, 1.442695
          %v774 = vpow.pop %v773
          %v775 = vmul.f32 %v754, 1.442695
          %v776 = vpow.pop %v775
          %v777 = vmul.f32 %v755, 1.442695
          %v778 = vpow.pop %v777
          %v779 = vmul.f32 %v756, 1.442695
          %v780 = vpow.pop %v779
          %v781 = vmul.f32 %v757, 1.442695
          %v782 = vpow.pop %v781
          %v783 = vmul.f32 %v758, 1.442695
          %v784 = vpow.pop %v783
          %v785 = vmul.f32 %v759, 1.442695
          %v786 = vpow.pop %v785
          %v787 = vmul.f32 %v760, 1.442695
          %v788 = vpow.pop %v787
          %v789 = vmul.f32 %v761, 1.442695
          %v790 = vpow.pop %v789
          %v791 = vmul.f32 %v762, 1.442695
          %v792 = vpow.pop %v791
          %v793 = vmul.f32 %v763, 1.442695
          %v794 = vpow.pop %v793
          %v795 = vmul.f32 %v764, 1.442695
          %v796 = vpow.pop %v795
          %v797 = vadd.f32 %v766, 1.0
          %v798 = vlog2.pop %v797
          %v799 = vmul.f32 %v798, 0.6931472
          %v800 = vmul.f32 -0.5, %v766
          %v801 = vadd.f32 %v800, 1.0
          %v802 = vmul.f32 %v801, %v766
          %v803 = vand.u32 2147483647, %v766
          %vm804 = vcmp.lt.f32.partialorder %v803, 0.0004427343
          %v805 = vsel %vm804, %v802, %v799
          %v806 = vadd.f32 %v768, 1.0
          %v807 = vlog2.pop %v806
          %v808 = vmul.f32 %v807, 0.6931472
          %v809 = vmul.f32 -0.5, %v768
          %v810 = vadd.f32 %v809, 1.0
          %v811 = vmul.f32 %v810, %v768
          %v812 = vand.u32 2147483647, %v768
          %vm813 = vcmp.lt.f32.partialorder %v812, 0.0004427343
          %v814 = vsel %vm813, %v811, %v808
          %v815 = vadd.f32 %v770, 1.0
          %v816 = vlog2.pop %v815
          %v817 = vmul.f32 %v816, 0.6931472
          %v818 = vmul.f32 -0.5, %v770
          %v819 = vadd.f32 %v818, 1.0
          %v820 = vmul.f32 %v819, %v770
          %v821 = vand.u32 2147483647, %v770
          %vm822 = vcmp.lt.f32.partialorder %v821, 0.0004427343
          %v823 = vsel %vm822, %v820, %v817
          %v824 = vadd.f32 %v772, 1.0
          %v825 = vlog2.pop %v824
          %v826 = vmul.f32 %v825, 0.6931472
          %v827 = vmul.f32 -0.5, %v772
          %v828 = vadd.f32 %v827, 1.0
          %v829 = vmul.f32 %v828, %v772
          %v830 = vand.u32 2147483647, %v772
          %vm831 = vcmp.lt.f32.partialorder %v830, 0.0004427343
          %v832 = vsel %vm831, %v829, %v826
          %v833 = vadd.f32 %v774, 1.0
          %v834 = vlog2.pop %v833
          %v835 = vmul.f32 %v834, 0.6931472
          %v836 = vmul.f32 -0.5, %v774
          %v837 = vadd.f32 %v836, 1.0
          %v838 = vmul.f32 %v837, %v774
          %v839 = vand.u32 2147483647, %v774
          %vm840 = vcmp.lt.f32.partialorder %v839, 0.0004427343
          %v841 = vsel %vm840, %v838, %v835
          %v842 = vadd.f32 %v776, 1.0
          %v843 = vlog2.pop %v842
          %v844 = vmul.f32 %v843, 0.6931472
          %v845 = vmul.f32 -0.5, %v776
          %v846 = vadd.f32 %v845, 1.0
          %v847 = vmul.f32 %v846, %v776
          %v848 = vand.u32 2147483647, %v776
          %vm849 = vcmp.lt.f32.partialorder %v848, 0.0004427343
          %v850 = vsel %vm849, %v847, %v844
          %v851 = vadd.f32 %v778, 1.0
          %v852 = vlog2.pop %v851
          %v853 = vmul.f32 %v852, 0.6931472
          %v854 = vmul.f32 -0.5, %v778
          %v855 = vadd.f32 %v854, 1.0
          %v856 = vmul.f32 %v855, %v778
          %v857 = vand.u32 2147483647, %v778
          %vm858 = vcmp.lt.f32.partialorder %v857, 0.0004427343
          %v859 = vsel %vm858, %v856, %v853
          %v860 = vadd.f32 %v780, 1.0
          %v861 = vlog2.pop %v860
          %v862 = vmul.f32 %v861, 0.6931472
          %v863 = vmul.f32 -0.5, %v780
          %v864 = vadd.f32 %v863, 1.0
          %v865 = vmul.f32 %v864, %v780
          %v866 = vand.u32 2147483647, %v780
          %vm867 = vcmp.lt.f32.partialorder %v866, 0.0004427343
          %v868 = vsel %vm867, %v865, %v862
          %v869 = vadd.f32 %v782, 1.0
          %v870 = vlog2.pop %v869
          %v871 = vmul.f32 %v870, 0.6931472
          %v872 = vmul.f32 -0.5, %v782
          %v873 = vadd.f32 %v872, 1.0
          %v874 = vmul.f32 %v873, %v782
          %v875 = vand.u32 2147483647, %v782
          %vm876 = vcmp.lt.f32.partialorder %v875, 0.0004427343
          %v877 = vsel %vm876, %v874, %v871
          %v878 = vadd.f32 %v784, 1.0
          %v879 = vlog2.pop %v878
          %v880 = vmul.f32 %v879, 0.6931472
          %v881 = vmul.f32 -0.5, %v784
          %v882 = vadd.f32 %v881, 1.0
          %v883 = vmul.f32 %v882, %v784
          %v884 = vand.u32 2147483647, %v784
          %vm885 = vcmp.lt.f32.partialorder %v884, 0.0004427343
          %v886 = vsel %vm885, %v883, %v880
          %v887 = vadd.f32 %v786, 1.0
          %v888 = vlog2.pop %v887
          %v889 = vmul.f32 %v888, 0.6931472
          %v890 = vmul.f32 -0.5, %v786
          %v891 = vadd.f32 %v890, 1.0
          %v892 = vmul.f32 %v891, %v786
          %v893 = vand.u32 2147483647, %v786
          %vm894 = vcmp.lt.f32.partialorder %v893, 0.0004427343
          %v895 = vsel %vm894, %v892, %v889
          %v896 = vadd.f32 %v788, 1.0
          %v897 = vlog2.pop %v896
          %v898 = vmul.f32 %v897, 0.6931472
          %v899 = vmul.f32 -0.5, %v788
          %v900 = vadd.f32 %v899, 1.0
          %v901 = vmul.f32 %v900, %v788
          %v902 = vand.u32 2147483647, %v788
          %vm903 = vcmp.lt.f32.partialorder %v902, 0.0004427343
          %v904 = vsel %vm903, %v901, %v898
          %v905 = vadd.f32 %v790, 1.0
          %v906 = vlog2.pop %v905
          %v907 = vmul.f32 %v906, 0.6931472
          %v908 = vmul.f32 -0.5, %v790
          %v909 = vadd.f32 %v908, 1.0
          %v910 = vmul.f32 %v909, %v790
          %v911 = vand.u32 2147483647, %v790
          %vm912 = vcmp.lt.f32.partialorder %v911, 0.0004427343
          %v913 = vsel %vm912, %v910, %v907
          %v914 = vadd.f32 %v792, 1.0
          %v915 = vlog2.pop %v914
          %v916 = vmul.f32 %v915, 0.6931472
          %v917 = vmul.f32 -0.5, %v792
          %v918 = vadd.f32 %v917, 1.0
          %v919 = vmul.f32 %v918, %v792
          %v920 = vand.u32 2147483647, %v792
          %vm921 = vcmp.lt.f32.partialorder %v920, 0.0004427343
          %v922 = vsel %vm921, %v919, %v916
          %v923 = vadd.f32 %v794, 1.0
          %v924 = vlog2.pop %v923
          %v925 = vmul.f32 %v924, 0.6931472
          %v926 = vmul.f32 -0.5, %v794
          %v927 = vadd.f32 %v926, 1.0
          %v928 = vmul.f32 %v927, %v794
          %v929 = vand.u32 2147483647, %v794
          %vm930 = vcmp.lt.f32.partialorder %v929, 0.0004427343
          %v931 = vsel %vm930, %v928, %v925
          %v932 = vadd.f32 %v796, 1.0
          %v933 = vlog2.pop %v932
          %v934 = vmul.f32 %v933, 0.6931472
          %v935 = vmul.f32 -0.5, %v796
          %v936 = vadd.f32 %v935, 1.0
          %v937 = vmul.f32 %v936, %v796
          %v938 = vand.u32 2147483647, %v796
          %vm939 = vcmp.lt.f32.partialorder %v938, 0.0004427343
          %v940 = vsel %vm939, %v937, %v934
          %v941 = vsel %vm733, %v686, %v805
          %v942 = vsel %vm734, %v689, %v814
          %v943 = vsel %vm735, %v692, %v823
          %v944 = vsel %vm736, %v695, %v832
          %v945 = vsel %vm737, %v698, %v841
          %v946 = vsel %vm738, %v701, %v850
          %v947 = vsel %vm739, %v704, %v859
          %v948 = vsel %vm740, %v707, %v868
          %v949 = vsel %vm741, %v710, %v877
          %v950 = vsel %vm742, %v713, %v886
          %v951 = vsel %vm743, %v716, %v895
          %v952 = vsel %vm744, %v719, %v904
          %v953 = vsel %vm745, %v722, %v913
          %v954 = vsel %vm746, %v725, %v922
          %v955 = vsel %vm747, %v728, %v931
          %v956 = vsel %vm748, %v731, %v940
          %v957 = vld [vmem:[%s554] sm:$0xff]
          %v958 = vld [vmem:[%s554 + $0x8] sm:$0xff]
          %v959 = vld [vmem:[%s554 + $0x10] sm:$0xff]
          %v960 = vld [vmem:[%s554 + $0x18] sm:$0xff]
          %v961 = vld [vmem:[%s561] sm:$0x1]
          %v963 = vperm.slane %v961, 0
          %vm965 = vcmask 261120
          %v967 = vsel %vm965, %v941, 0
          %v970 = vsel %vm965, %v942, 0
          %v973 = vsel %vm965, %v943, 0
          %v976 = vsel %vm965, %v944, 0
          %v979 = vsel %vm965, %v945, 0
          %v982 = vsel %vm965, %v946, 0
          %v985 = vsel %vm965, %v947, 0
          %v988 = vsel %vm965, %v948, 0
          %v991 = vsel %vm965, %v949, 0
          %v994 = vsel %vm965, %v950, 0
          %v997 = vsel %vm965, %v951, 0
          %v1000 = vsel %vm965, %v952, 0
          %v1003 = vsel %vm965, %v953, 0
          %v1006 = vsel %vm965, %v954, 0
          %v1009 = vsel %vm965, %v955, 0
          %v1012 = vsel %vm965, %v956, 0
          %1014 = vmatpush.msra.mxu0 0.0
          %1015 = vmatpush.msra.mxu0 0.0
          %1016 = vmatpush.msra.mxu0 0.0
          %1017 = vmatpush.msra.mxu0 0.0
          %1018 = vmatpush.msra.mxu0 0.0
          %1019 = vmatpush.msra.mxu0 0.0
          %1020 = vmatpush.msra.mxu0 0.0
          %1021 = vmatpush.msra.mxu0 0.0
          %1022 = vmatpush.msra.mxu0 0.0
          %1023 = vmatpush.msra.mxu0 0.0
          %1024 = vmatpush.msra.mxu0 0.0
          %1025 = vmatpush.msra.mxu0 0.0
          %1026 = vmatpush.msra.mxu0 %v960
          %1027 = vmatpush.msra.mxu0 %v959
          %1028 = vmatpush.msra.mxu0 %v958
          %1029 = vmatpush.msra.mxu0 %v957
          %1030 = vmatmul.f32.gmra.mxu0 %v967
          %v1031 = vpop.f32.mrf.mxu0
          %v1032 = vadd.f32 %v963, %v1031
          %1033 = vmatmul.f32.gmra.mxu0 %v970
          %v1034 = vpop.f32.mrf.mxu0
          %v1035 = vadd.f32 %v963, %v1034
          %1036 = vmatmul.f32.gmra.mxu0 %v973
          %v1037 = vpop.f32.mrf.mxu0
          %v1038 = vadd.f32 %v963, %v1037
          %1039 = vmatmul.f32.gmra.mxu0 %v976
          %v1040 = vpop.f32.mrf.mxu0
          %v1041 = vadd.f32 %v963, %v1040
          %1042 = vmatmul.f32.gmra.mxu0 %v979
          %v1043 = vpop.f32.mrf.mxu0
          %v1044 = vadd.f32 %v963, %v1043
          %1045 = vmatmul.f32.gmra.mxu0 %v982
          %v1046 = vpop.f32.mrf.mxu0
          %v1047 = vadd.f32 %v963, %v1046
          %1048 = vmatmul.f32.gmra.mxu0 %v985
          %v1049 = vpop.f32.mrf.mxu0
          %v1050 = vadd.f32 %v963, %v1049
          %1051 = vmatmul.f32.gmra.mxu0 %v988
          %v1052 = vpop.f32.mrf.mxu0
          %v1053 = vadd.f32 %v963, %v1052
          %1054 = vmatmul.f32.gmra.mxu0 %v991
          %v1055 = vpop.f32.mrf.mxu0
          %v1056 = vadd.f32 %v963, %v1055
          %1057 = vmatmul.f32.gmra.mxu0 %v994
          %v1058 = vpop.f32.mrf.mxu0
          %v1059 = vadd.f32 %v963, %v1058
          %1060 = vmatmul.f32.gmra.mxu0 %v997
          %v1061 = vpop.f32.mrf.mxu0
          %v1062 = vadd.f32 %v963, %v1061
          %1063 = vmatmul.f32.gmra.mxu0 %v1000
          %v1064 = vpop.f32.mrf.mxu0
          %v1065 = vadd.f32 %v963, %v1064
          %1066 = vmatmul.f32.gmra.mxu0 %v1003
          %v1067 = vpop.f32.mrf.mxu0
          %v1068 = vadd.f32 %v963, %v1067
          %1069 = vmatmul.f32.gmra.mxu0 %v1006
          %v1070 = vpop.f32.mrf.mxu0
          %v1071 = vadd.f32 %v963, %v1070
          %1072 = vmatmul.f32.gmra.mxu0 %v1009
          %v1073 = vpop.f32.mrf.mxu0
          %v1074 = vadd.f32 %v963, %v1073
          %1075 = vmatmul.f32.gmra.mxu0 %v1012
          %v1076 = vpop.f32.mrf.mxu0
          %v1077 = vadd.f32 %v963, %v1076
          %1078 = vdwg.mxu0
          %vm1079 = vcmp.gt.f32.partialorder %v1032, 20.0
          %vm1080 = vcmp.gt.f32.partialorder %v1035, 20.0
          %vm1081 = vcmp.gt.f32.partialorder %v1038, 20.0
          %vm1082 = vcmp.gt.f32.partialorder %v1041, 20.0
          %vm1083 = vcmp.gt.f32.partialorder %v1044, 20.0
          %vm1084 = vcmp.gt.f32.partialorder %v1047, 20.0
          %vm1085 = vcmp.gt.f32.partialorder %v1050, 20.0
          %vm1086 = vcmp.gt.f32.partialorder %v1053, 20.0
          %vm1087 = vcmp.gt.f32.partialorder %v1056, 20.0
          %vm1088 = vcmp.gt.f32.partialorder %v1059, 20.0
          %vm1089 = vcmp.gt.f32.partialorder %v1062, 20.0
          %vm1090 = vcmp.gt.f32.partialorder %v1065, 20.0
          %vm1091 = vcmp.gt.f32.partialorder %v1068, 20.0
          %vm1092 = vcmp.gt.f32.partialorder %v1071, 20.0
          %vm1093 = vcmp.gt.f32.partialorder %v1074, 20.0
          %vm1094 = vcmp.gt.f32.partialorder %v1077, 20.0
          %v1095 = vmin.f32 %v1032, 20.0
          %v1096 = vmin.f32 %v1035, 20.0
          %v1097 = vmin.f32 %v1038, 20.0
          %v1098 = vmin.f32 %v1041, 20.0
          %v1099 = vmin.f32 %v1044, 20.0
          %v1100 = vmin.f32 %v1047, 20.0
          %v1101 = vmin.f32 %v1050, 20.0
          %v1102 = vmin.f32 %v1053, 20.0
          %v1103 = vmin.f32 %v1056, 20.0
          %v1104 = vmin.f32 %v1059, 20.0
          %v1105 = vmin.f32 %v1062, 20.0
          %v1106 = vmin.f32 %v1065, 20.0
          %v1107 = vmin.f32 %v1068, 20.0
          %v1108 = vmin.f32 %v1071, 20.0
          %v1109 = vmin.f32 %v1074, 20.0
          %v1110 = vmin.f32 %v1077, 20.0
          %v1111 = vmul.f32 %v1095, 1.442695
          %v1112 = vpow.pop %v1111
          %v1113 = vmul.f32 %v1096, 1.442695
          %v1114 = vpow.pop %v1113
          %v1115 = vmul.f32 %v1097, 1.442695
          %v1116 = vpow.pop %v1115
          %v1117 = vmul.f32 %v1098, 1.442695
          %v1118 = vpow.pop %v1117
          %v1119 = vmul.f32 %v1099, 1.442695
          %v1120 = vpow.pop %v1119
          %v1121 = vmul.f32 %v1100, 1.442695
          %v1122 = vpow.pop %v1121
          %v1123 = vmul.f32 %v1101, 1.442695
          %v1124 = vpow.pop %v1123
          %v1125 = vmul.f32 %v1102, 1.442695
          %v1126 = vpow.pop %v1125
          %v1127 = vmul.f32 %v1103, 1.442695
          %v1128 = vpow.pop %v1127
          %v1129 = vmul.f32 %v1104, 1.442695
          %v1130 = vpow.pop %v1129
          %v1131 = vmul.f32 %v1105, 1.442695
          %v1132 = vpow.pop %v1131
          %v1133 = vmul.f32 %v1106, 1.442695
          %v1134 = vpow.pop %v1133
          %v1135 = vmul.f32 %v1107, 1.442695
          %v1136 = vpow.pop %v1135
          %v1137 = vmul.f32 %v1108, 1.442695
          %v1138 = vpow.pop %v1137
          %v1139 = vmul.f32 %v1109, 1.442695
          %v1140 = vpow.pop %v1139
          %v1141 = vmul.f32 %v1110, 1.442695
          %v1142 = vpow.pop %v1141
          %v1143 = vadd.f32 %v1112, 1.0
          %v1144 = vlog2.pop %v1143
          %v1145 = vmul.f32 %v1144, 0.6931472
          %v1146 = vmul.f32 -0.5, %v1112
          %v1147 = vadd.f32 %v1146, 1.0
          %v1148 = vmul.f32 %v1147, %v1112
          %v1149 = vand.u32 2147483647, %v1112
          %vm1150 = vcmp.lt.f32.partialorder %v1149, 0.0004427343
          %v1151 = vsel %vm1150, %v1148, %v1145
          %v1152 = vadd.f32 %v1114, 1.0
          %v1153 = vlog2.pop %v1152
          %v1154 = vmul.f32 %v1153, 0.6931472
          %v1155 = vmul.f32 -0.5, %v1114
          %v1156 = vadd.f32 %v1155, 1.0
          %v1157 = vmul.f32 %v1156, %v1114
          %v1158 = vand.u32 2147483647, %v1114
          %vm1159 = vcmp.lt.f32.partialorder %v1158, 0.0004427343
          %v1160 = vsel %vm1159, %v1157, %v1154
          %v1161 = vadd.f32 %v1116, 1.0
          %v1162 = vlog2.pop %v1161
          %v1163 = vmul.f32 %v1162, 0.6931472
          %v1164 = vmul.f32 -0.5, %v1116
          %v1165 = vadd.f32 %v1164, 1.0
          %v1166 = vmul.f32 %v1165, %v1116
          %v1167 = vand.u32 2147483647, %v1116
          %vm1168 = vcmp.lt.f32.partialorder %v1167, 0.0004427343
          %v1169 = vsel %vm1168, %v1166, %v1163
          %v1170 = vadd.f32 %v1118, 1.0
          %v1171 = vlog2.pop %v1170
          %v1172 = vmul.f32 %v1171, 0.6931472
          %v1173 = vmul.f32 -0.5, %v1118
          %v1174 = vadd.f32 %v1173, 1.0
          %v1175 = vmul.f32 %v1174, %v1118
          %v1176 = vand.u32 2147483647, %v1118
          %vm1177 = vcmp.lt.f32.partialorder %v1176, 0.0004427343
          %v1178 = vsel %vm1177, %v1175, %v1172
          %v1179 = vadd.f32 %v1120, 1.0
          %v1180 = vlog2.pop %v1179
          %v1181 = vmul.f32 %v1180, 0.6931472
          %v1182 = vmul.f32 -0.5, %v1120
          %v1183 = vadd.f32 %v1182, 1.0
          %v1184 = vmul.f32 %v1183, %v1120
          %v1185 = vand.u32 2147483647, %v1120
          %vm1186 = vcmp.lt.f32.partialorder %v1185, 0.0004427343
          %v1187 = vsel %vm1186, %v1184, %v1181
          %v1188 = vadd.f32 %v1122, 1.0
          %v1189 = vlog2.pop %v1188
          %v1190 = vmul.f32 %v1189, 0.6931472
          %v1191 = vmul.f32 -0.5, %v1122
          %v1192 = vadd.f32 %v1191, 1.0
          %v1193 = vmul.f32 %v1192, %v1122
          %v1194 = vand.u32 2147483647, %v1122
          %vm1195 = vcmp.lt.f32.partialorder %v1194, 0.0004427343
          %v1196 = vsel %vm1195, %v1193, %v1190
          %v1197 = vadd.f32 %v1124, 1.0
          %v1198 = vlog2.pop %v1197
          %v1199 = vmul.f32 %v1198, 0.6931472
          %v1200 = vmul.f32 -0.5, %v1124
          %v1201 = vadd.f32 %v1200, 1.0
          %v1202 = vmul.f32 %v1201, %v1124
          %v1203 = vand.u32 2147483647, %v1124
          %vm1204 = vcmp.lt.f32.partialorder %v1203, 0.0004427343
          %v1205 = vsel %vm1204, %v1202, %v1199
          %v1206 = vadd.f32 %v1126, 1.0
          %v1207 = vlog2.pop %v1206
          %v1208 = vmul.f32 %v1207, 0.6931472
          %v1209 = vmul.f32 -0.5, %v1126
          %v1210 = vadd.f32 %v1209, 1.0
          %v1211 = vmul.f32 %v1210, %v1126
          %v1212 = vand.u32 2147483647, %v1126
          %vm1213 = vcmp.lt.f32.partialorder %v1212, 0.0004427343
          %v1214 = vsel %vm1213, %v1211, %v1208
          %v1215 = vadd.f32 %v1128, 1.0
          %v1216 = vlog2.pop %v1215
          %v1217 = vmul.f32 %v1216, 0.6931472
          %v1218 = vmul.f32 -0.5, %v1128
          %v1219 = vadd.f32 %v1218, 1.0
          %v1220 = vmul.f32 %v1219, %v1128
          %v1221 = vand.u32 2147483647, %v1128
          %vm1222 = vcmp.lt.f32.partialorder %v1221, 0.0004427343
          %v1223 = vsel %vm1222, %v1220, %v1217
          %v1224 = vadd.f32 %v1130, 1.0
          %v1225 = vlog2.pop %v1224
          %v1226 = vmul.f32 %v1225, 0.6931472
          %v1227 = vmul.f32 -0.5, %v1130
          %v1228 = vadd.f32 %v1227, 1.0
          %v1229 = vmul.f32 %v1228, %v1130
          %v1230 = vand.u32 2147483647, %v1130
          %vm1231 = vcmp.lt.f32.partialorder %v1230, 0.0004427343
          %v1232 = vsel %vm1231, %v1229, %v1226
          %v1233 = vadd.f32 %v1132, 1.0
          %v1234 = vlog2.pop %v1233
          %v1235 = vmul.f32 %v1234, 0.6931472
          %v1236 = vmul.f32 -0.5, %v1132
          %v1237 = vadd.f32 %v1236, 1.0
          %v1238 = vmul.f32 %v1237, %v1132
          %v1239 = vand.u32 2147483647, %v1132
          %vm1240 = vcmp.lt.f32.partialorder %v1239, 0.0004427343
          %v1241 = vsel %vm1240, %v1238, %v1235
          %v1242 = vadd.f32 %v1134, 1.0
          %v1243 = vlog2.pop %v1242
          %v1244 = vmul.f32 %v1243, 0.6931472
          %v1245 = vmul.f32 -0.5, %v1134
          %v1246 = vadd.f32 %v1245, 1.0
          %v1247 = vmul.f32 %v1246, %v1134
          %v1248 = vand.u32 2147483647, %v1134
          %vm1249 = vcmp.lt.f32.partialorder %v1248, 0.0004427343
          %v1250 = vsel %vm1249, %v1247, %v1244
          %v1251 = vadd.f32 %v1136, 1.0
          %v1252 = vlog2.pop %v1251
          %v1253 = vmul.f32 %v1252, 0.6931472
          %v1254 = vmul.f32 -0.5, %v1136
          %v1255 = vadd.f32 %v1254, 1.0
          %v1256 = vmul.f32 %v1255, %v1136
          %v1257 = vand.u32 2147483647, %v1136
          %vm1258 = vcmp.lt.f32.partialorder %v1257, 0.0004427343
          %v1259 = vsel %vm1258, %v1256, %v1253
          %v1260 = vadd.f32 %v1138, 1.0
          %v1261 = vlog2.pop %v1260
          %v1262 = vmul.f32 %v1261, 0.6931472
          %v1263 = vmul.f32 -0.5, %v1138
          %v1264 = vadd.f32 %v1263, 1.0
          %v1265 = vmul.f32 %v1264, %v1138
          %v1266 = vand.u32 2147483647, %v1138
          %vm1267 = vcmp.lt.f32.partialorder %v1266, 0.0004427343
          %v1268 = vsel %vm1267, %v1265, %v1262
          %v1269 = vadd.f32 %v1140, 1.0
          %v1270 = vlog2.pop %v1269
          %v1271 = vmul.f32 %v1270, 0.6931472
          %v1272 = vmul.f32 -0.5, %v1140
          %v1273 = vadd.f32 %v1272, 1.0
          %v1274 = vmul.f32 %v1273, %v1140
          %v1275 = vand.u32 2147483647, %v1140
          %vm1276 = vcmp.lt.f32.partialorder %v1275, 0.0004427343
          %v1277 = vsel %vm1276, %v1274, %v1271
          %v1278 = vadd.f32 %v1142, 1.0
          %v1279 = vlog2.pop %v1278
          %v1280 = vmul.f32 %v1279, 0.6931472
          %v1281 = vmul.f32 -0.5, %v1142
          %v1282 = vadd.f32 %v1281, 1.0
          %v1283 = vmul.f32 %v1282, %v1142
          %v1284 = vand.u32 2147483647, %v1142
          %vm1285 = vcmp.lt.f32.partialorder %v1284, 0.0004427343
          %v1286 = vsel %vm1285, %v1283, %v1280
          %v1287 = vsel %vm1079, %v1032, %v1151
          %v1288 = vsel %vm1080, %v1035, %v1160
          %v1289 = vsel %vm1081, %v1038, %v1169
          %v1290 = vsel %vm1082, %v1041, %v1178
          %v1291 = vsel %vm1083, %v1044, %v1187
          %v1292 = vsel %vm1084, %v1047, %v1196
          %v1293 = vsel %vm1085, %v1050, %v1205
          %v1294 = vsel %vm1086, %v1053, %v1214
          %v1295 = vsel %vm1087, %v1056, %v1223
          %v1296 = vsel %vm1088, %v1059, %v1232
          %v1297 = vsel %vm1089, %v1062, %v1241
          %v1298 = vsel %vm1090, %v1065, %v1250
          %v1299 = vsel %vm1091, %v1068, %v1259
          %v1300 = vsel %vm1092, %v1071, %v1268
          %v1301 = vsel %vm1093, %v1074, %v1277
          %v1302 = vsel %vm1094, %v1077, %v1286
          %v1303 = vld [vmem:[%s570] sm:$0xff]
          %v1304 = vld [vmem:[%s570 + $0x8] sm:$0xff]
          %v1305 = vld [vmem:[%s570 + $0x10] sm:$0xff]
          %v1306 = vld [vmem:[%s570 + $0x18] sm:$0xff]
          %v1307 = vld [vmem:[%s577] sm:$0x1]
          %v1309 = vperm.slane %v1307, 0
          %v1312 = vsel %vm965, %v1287, 0
          %v1315 = vsel %vm965, %v1288, 0
          %v1318 = vsel %vm965, %v1289, 0
          %v1321 = vsel %vm965, %v1290, 0
          %v1324 = vsel %vm965, %v1291, 0
          %v1327 = vsel %vm965, %v1292, 0
          %v1330 = vsel %vm965, %v1293, 0
          %v1333 = vsel %vm965, %v1294, 0
          %v1336 = vsel %vm965, %v1295, 0
          %v1339 = vsel %vm965, %v1296, 0
          %v1342 = vsel %vm965, %v1297, 0
          %v1345 = vsel %vm965, %v1298, 0
          %v1348 = vsel %vm965, %v1299, 0
          %v1351 = vsel %vm965, %v1300, 0
          %v1354 = vsel %vm965, %v1301, 0
          %v1357 = vsel %vm965, %v1302, 0
          %1359 = vmatpush.msra.mxu0 0.0
          %1360 = vmatpush.msra.mxu0 0.0
          %1361 = vmatpush.msra.mxu0 0.0
          %1362 = vmatpush.msra.mxu0 0.0
          %1363 = vmatpush.msra.mxu0 0.0
          %1364 = vmatpush.msra.mxu0 0.0
          %1365 = vmatpush.msra.mxu0 0.0
          %1366 = vmatpush.msra.mxu0 0.0
          %1367 = vmatpush.msra.mxu0 0.0
          %1368 = vmatpush.msra.mxu0 0.0
          %1369 = vmatpush.msra.mxu0 0.0
          %1370 = vmatpush.msra.mxu0 0.0
          %1371 = vmatpush.msra.mxu0 %v1306
          %1372 = vmatpush.msra.mxu0 %v1305
          %1373 = vmatpush.msra.mxu0 %v1304
          %1374 = vmatpush.msra.mxu0 %v1303
          %1375 = vmatmul.f32.gmra.mxu0 %v1312
          %v1376 = vpop.f32.mrf.mxu0
          %v1377 = vadd.f32 %v1309, %v1376
          %1378 = vmatmul.f32.gmra.mxu0 %v1315
          %v1379 = vpop.f32.mrf.mxu0
          %v1380 = vadd.f32 %v1309, %v1379
          %1381 = vmatmul.f32.gmra.mxu0 %v1318
          %v1382 = vpop.f32.mrf.mxu0
          %v1383 = vadd.f32 %v1309, %v1382
          %1384 = vmatmul.f32.gmra.mxu0 %v1321
          %v1385 = vpop.f32.mrf.mxu0
          %v1386 = vadd.f32 %v1309, %v1385
          %1387 = vmatmul.f32.gmra.mxu0 %v1324
          %v1388 = vpop.f32.mrf.mxu0
          %v1389 = vadd.f32 %v1309, %v1388
          %1390 = vmatmul.f32.gmra.mxu0 %v1327
          %v1391 = vpop.f32.mrf.mxu0
          %v1392 = vadd.f32 %v1309, %v1391
          %1393 = vmatmul.f32.gmra.mxu0 %v1330
          %v1394 = vpop.f32.mrf.mxu0
          %v1395 = vadd.f32 %v1309, %v1394
          %1396 = vmatmul.f32.gmra.mxu0 %v1333
          %v1397 = vpop.f32.mrf.mxu0
          %v1398 = vadd.f32 %v1309, %v1397
          %1399 = vmatmul.f32.gmra.mxu0 %v1336
          %v1400 = vpop.f32.mrf.mxu0
          %v1401 = vadd.f32 %v1309, %v1400
          %1402 = vmatmul.f32.gmra.mxu0 %v1339
          %v1403 = vpop.f32.mrf.mxu0
          %v1404 = vadd.f32 %v1309, %v1403
          %1405 = vmatmul.f32.gmra.mxu0 %v1342
          %v1406 = vpop.f32.mrf.mxu0
          %v1407 = vadd.f32 %v1309, %v1406
          %1408 = vmatmul.f32.gmra.mxu0 %v1345
          %v1409 = vpop.f32.mrf.mxu0
          %v1410 = vadd.f32 %v1309, %v1409
          %1411 = vmatmul.f32.gmra.mxu0 %v1348
          %v1412 = vpop.f32.mrf.mxu0
          %v1413 = vadd.f32 %v1309, %v1412
          %1414 = vmatmul.f32.gmra.mxu0 %v1351
          %v1415 = vpop.f32.mrf.mxu0
          %v1416 = vadd.f32 %v1309, %v1415
          %1417 = vmatmul.f32.gmra.mxu0 %v1354
          %v1418 = vpop.f32.mrf.mxu0
          %v1419 = vadd.f32 %v1309, %v1418
          %1420 = vmatmul.f32.gmra.mxu0 %v1357
          %v1421 = vpop.f32.mrf.mxu0
          %v1422 = vadd.f32 %v1309, %v1421
          %1423 = vdwg.mxu0
          %s1424 = sld [smem:[#allocation5 + %s580]]
          %v1425 = vld [vmem:[%s528] sm:$0xff]
          %v1426 = vld [vmem:[%s528 + $0x8] sm:$0xff]
          %v1427 = vld [vmem:[%s528 + $0x10] sm:$0xff]
          %v1428 = vld [vmem:[%s528 + $0x18] sm:$0xff]
          %v1429 = vld [vmem:[%s528 + $0x20] sm:$0xff]
          %v1430 = vld [vmem:[%s528 + $0x28] sm:$0xff]
          %v1431 = vld [vmem:[%s528 + $0x30] sm:$0xff]
          %v1432 = vld [vmem:[%s528 + $0x38] sm:$0xff]
          %v1433 = vld [vmem:[%s528 + $0x40] sm:$0xff]
          %v1434 = vld [vmem:[%s528 + $0x48] sm:$0xff]
          %v1435 = vld [vmem:[%s528 + $0x50] sm:$0xff]
          %v1436 = vld [vmem:[%s528 + $0x58] sm:$0xff]
          %v1437 = vld [vmem:[%s528 + $0x60] sm:$0xff]
          %v1438 = vld [vmem:[%s528 + $0x68] sm:$0xff]
          %v1439 = vld [vmem:[%s528 + $0x70] sm:$0xff]
          %v1440 = vld [vmem:[%s528 + $0x78] sm:$0xff]
          %v1441 = vstv %s1424
          %v1442 = vsub.s32 %v1425, %v1441
          %v1443 = vsub.s32 %v1426, %v1441
          %v1444 = vsub.s32 %v1427, %v1441
          %v1445 = vsub.s32 %v1428, %v1441
          %v1446 = vsub.s32 %v1429, %v1441
          %v1447 = vsub.s32 %v1430, %v1441
          %v1448 = vsub.s32 %v1431, %v1441
          %v1449 = vsub.s32 %v1432, %v1441
          %v1450 = vsub.s32 %v1433, %v1441
          %v1451 = vsub.s32 %v1434, %v1441
          %v1452 = vsub.s32 %v1435, %v1441
          %v1453 = vsub.s32 %v1436, %v1441
          %v1454 = vsub.s32 %v1437, %v1441
          %v1455 = vsub.s32 %v1438, %v1441
          %v1456 = vsub.s32 %v1439, %v1441
          %v1457 = vsub.s32 %v1440, %v1441
          %v1458 = vlaneseq
          %v1459 = vand.u32 %v1458, 127
          %1460 = vset.pattern.permute.xlu0 0
          %1461 = vperm.xlu0 %1460, %v1442
          %v1462 = vpop.permute.xlu0 %1461
          %1463 = vset.pattern.permute.xlu0 0
          %1464 = vperm.xlu0 %1463, %v1443
          %v1465 = vpop.permute.xlu0 %1464
          %1466 = vset.pattern.permute.xlu0 0
          %1467 = vperm.xlu0 %1466, %v1444
          %v1468 = vpop.permute.xlu0 %1467
          %1469 = vset.pattern.permute.xlu0 0
          %1470 = vperm.xlu0 %1469, %v1445
          %v1471 = vpop.permute.xlu0 %1470
          %1472 = vset.pattern.permute.xlu0 0
          %1473 = vperm.xlu0 %1472, %v1446
          %v1474 = vpop.permute.xlu0 %1473
          %1475 = vset.pattern.permute.xlu0 0
          %1476 = vperm.xlu0 %1475, %v1447
          %v1477 = vpop.permute.xlu0 %1476
          %1478 = vset.pattern.permute.xlu0 0
          %1479 = vperm.xlu0 %1478, %v1448
          %v1480 = vpop.permute.xlu0 %1479
          %1481 = vset.pattern.permute.xlu0 0
          %1482 = vperm.xlu0 %1481, %v1449
          %v1483 = vpop.permute.xlu0 %1482
          %1484 = vset.pattern.permute.xlu0 0
          %1485 = vperm.xlu0 %1484, %v1450
          %v1486 = vpop.permute.xlu0 %1485
          %1487 = vset.pattern.permute.xlu0 0
          %1488 = vperm.xlu0 %1487, %v1451
          %v1489 = vpop.permute.xlu0 %1488
          %1490 = vset.pattern.permute.xlu0 0
          %1491 = vperm.xlu0 %1490, %v1452
          %v1492 = vpop.permute.xlu0 %1491
          %1493 = vset.pattern.permute.xlu0 0
          %1494 = vperm.xlu0 %1493, %v1453
          %v1495 = vpop.permute.xlu0 %1494
          %1496 = vset.pattern.permute.xlu0 0
          %1497 = vperm.xlu0 %1496, %v1454
          %v1498 = vpop.permute.xlu0 %1497
          %1499 = vset.pattern.permute.xlu0 0
          %1500 = vperm.xlu0 %1499, %v1455
          %v1501 = vpop.permute.xlu0 %1500
          %1502 = vset.pattern.permute.xlu0 0
          %1503 = vperm.xlu0 %1502, %v1456
          %v1504 = vpop.permute.xlu0 %1503
          %1505 = vset.pattern.permute.xlu0 0
          %1506 = vperm.xlu0 %1505, %v1457
          %v1507 = vpop.permute.xlu0 %1506
          %vm1508 = vcmp.eq.s32.totalorder %v1462, %v1459
          %vm1509 = vcmp.eq.s32.totalorder %v1465, %v1459
          %vm1510 = vcmp.eq.s32.totalorder %v1468, %v1459
          %vm1511 = vcmp.eq.s32.totalorder %v1471, %v1459
          %vm1512 = vcmp.eq.s32.totalorder %v1474, %v1459
          %vm1513 = vcmp.eq.s32.totalorder %v1477, %v1459
          %vm1514 = vcmp.eq.s32.totalorder %v1480, %v1459
          %vm1515 = vcmp.eq.s32.totalorder %v1483, %v1459
          %vm1516 = vcmp.eq.s32.totalorder %v1486, %v1459
          %vm1517 = vcmp.eq.s32.totalorder %v1489, %v1459
          %vm1518 = vcmp.eq.s32.totalorder %v1492, %v1459
          %vm1519 = vcmp.eq.s32.totalorder %v1495, %v1459
          %vm1520 = vcmp.eq.s32.totalorder %v1498, %v1459
          %vm1521 = vcmp.eq.s32.totalorder %v1501, %v1459
          %vm1522 = vcmp.eq.s32.totalorder %v1504, %v1459
          %vm1523 = vcmp.eq.s32.totalorder %v1507, %v1459
          %v1524 = vsel %vm1508, 1, 0
          %v1525 = vsel %vm1509, 1, 0
          %v1526 = vsel %vm1510, 1, 0
          %v1527 = vsel %vm1511, 1, 0
          %v1528 = vsel %vm1512, 1, 0
          %v1529 = vsel %vm1513, 1, 0
          %v1530 = vsel %vm1514, 1, 0
          %v1531 = vsel %vm1515, 1, 0
          %v1532 = vsel %vm1516, 1, 0
          %v1533 = vsel %vm1517, 1, 0
          %v1534 = vsel %vm1518, 1, 0
          %v1535 = vsel %vm1519, 1, 0
          %v1536 = vsel %vm1520, 1, 0
          %v1537 = vsel %vm1521, 1, 0
          %v1538 = vsel %vm1522, 1, 0
          %v1539 = vsel %vm1523, 1, 0
          %v1540 = vcvt.s32.f32 %v1524
          %v1541 = vcvt.s32.f32 %v1525
          %v1542 = vcvt.s32.f32 %v1526
          %v1543 = vcvt.s32.f32 %v1527
          %v1544 = vcvt.s32.f32 %v1528
          %v1545 = vcvt.s32.f32 %v1529
          %v1546 = vcvt.s32.f32 %v1530
          %v1547 = vcvt.s32.f32 %v1531
          %v1548 = vcvt.s32.f32 %v1532
          %v1549 = vcvt.s32.f32 %v1533
          %v1550 = vcvt.s32.f32 %v1534
          %v1551 = vcvt.s32.f32 %v1535
          %v1552 = vcvt.s32.f32 %v1536
          %v1553 = vcvt.s32.f32 %v1537
          %v1554 = vcvt.s32.f32 %v1538
          %v1555 = vcvt.s32.f32 %v1539
          %v1556 = vpack.c.bf16 %v1541, %v1540
          %v1557 = vpack.c.bf16 %v1543, %v1542
          %v1558 = vpack.c.bf16 %v1545, %v1544
          %v1559 = vpack.c.bf16 %v1547, %v1546
          %v1560 = vpack.c.bf16 %v1549, %v1548
          %v1561 = vpack.c.bf16 %v1551, %v1550
          %v1562 = vpack.c.bf16 %v1553, %v1552
          %v1563 = vpack.c.bf16 %v1555, %v1554
          %v1564 = vpack.c.bf16 %v1380, %v1377
          %v1565 = vpack.c.bf16 %v1386, %v1383
          %v1566 = vpack.c.bf16 %v1392, %v1389
          %v1567 = vpack.c.bf16 %v1398, %v1395
          %v1568 = vpack.c.bf16 %v1404, %v1401
          %v1569 = vpack.c.bf16 %v1410, %v1407
          %v1570 = vpack.c.bf16 %v1416, %v1413
          %v1571 = vpack.c.bf16 %v1422, %v1419
          %1572 = vxpose.xlu0.c.b16.start [1/8] %v1564, 128
          %1573 = vxpose.xlu0.c.b16.cont [2/8] %v1565, 128
          %1574 = vxpose.xlu0.c.b16.cont [3/8] %v1566, 128
          %1575 = vxpose.xlu0.c.b16.cont [4/8] %v1567, 128
          %1576 = vxpose.xlu0.c.b16.cont [5/8] %v1568, 128
          %1577 = vxpose.xlu0.c.b16.cont [6/8] %v1569, 128
          %1578 = vxpose.xlu0.c.b16.cont [7/8] %v1570, 128
          %1579 = vxpose.xlu0.c.b16.end [8/8] %v1571, 128
          %v1580 = vpop.trf.xlu0
          %v1581 = vpop.trf.xlu0
          %v1582 = vpop.trf.xlu0
          %v1583 = vpop.trf.xlu0
          %v1584 = vpop.trf.xlu0
          %v1585 = vpop.trf.xlu0
          %v1586 = vpop.trf.xlu0
          %v1587 = vpop.trf.xlu0
          %1588 = vmatpush.bf16.msra.mxu0 %v1563
          %1589 = vmatpush.bf16.msra.mxu0 %v1562
          %1590 = vmatpush.bf16.msra.mxu0 %v1561
          %1591 = vmatpush.bf16.msra.mxu0 %v1560
          %1592 = vmatpush.bf16.msra.mxu0 %v1559
          %1593 = vmatpush.bf16.msra.mxu0 %v1558
          %1594 = vmatpush.bf16.msra.mxu0 %v1557
          %1595 = vmatpush.bf16.msra.mxu0 %v1556
          %1596 = vmatmul.bf16.gmra.mxu0 %v1580
          %v1597 = vpop.f32.mrf.mxu0
          %v1598 = vadd.f32 0.0, %v1597
          %v1599 = vpop.f32.mrf.mxu0
          %1600 = vdwg.mxu0
          %v1601 = vld [vmem:[%s511] sm:$0x1]
          %v1602 = vadd.f32 %v1601, %v1598
          %1603 = vst [vmem:[%s511] sm:$0x1] %v1602
        $region60: #{tpu_custom_call.1} parent=51 // pred_fallthru
          _
        %s1604 = sand.u32 %s309, 1
        %s1605 = scalar_lea.sflag [#allocation8], %s1604
        %s1606 = sand.u32 %s309, 1
        %s1607 = scalar_lea.vmem [#allocation7], %s1606
        // Predicated region
        $region61: #{tpu_custom_call.1} parent=51 // pred_check
          %p1608 = pneg %p319
        $region62: #{tpu_custom_call.1} parent=51 // pred_check_branch
          %1610 = sbr.rel (%p1608) target = $region64
        $region63: #{tpu_custom_call.1} parent=51 // pred_region
          %1612 = vsyncadd %s1605, 0
          %s1613 = scalar_lea.hbm %s12, %s53
          %s1615 = sshll.u32 %s1607, 4
          %s1616 = int_to_ptr.vmem [resolvable:$true] %s1615
          %s1617 = sshll.u32 %s1613, 4
          %s1618 = int_to_ptr.hbm [resolvable:$true] %s1617
          %1620 = dma.vmem_to_hbm [thread:$0]  %s1616, 16, %s1618, %s1605
        $region64: #{tpu_custom_call.1} parent=51 // pred_fallthru
          _
      $region52: #{tpu_custom_call.1} parent=5 // pred_fallthru
        _
      %p1621 = scmp.le.s32.totalorder 2, %s44
      // Predicated region
      $region65: #{tpu_custom_call.1} parent=5 // pred_check
        %p1622 = pneg %p1621
      $region66: #{tpu_custom_call.1} parent=5 // pred_check_branch
        %1624 = sbr.rel (%p1622) target = $region68
      $region67: #{tpu_custom_call.1} parent=5 // pred_region
        %s1625 = ssub.s32 %s44, 2
        // Predicated region
        $region69: #{tpu_custom_call.1} parent=67 // pred_check
          %p1626 = pneg %p325
        $region70: #{tpu_custom_call.1} parent=67 // pred_check_branch
          %1628 = sbr.rel (%p1626) target = $region72
        $region71: #{tpu_custom_call.1} parent=67 // pred_region
          %s1629 = sand.u32 %s310, 1
          %s1630 = scalar_lea.sflag [#allocation8], %s1629
          %s1631 = sand.u32 %s310, 1
          %s1632 = scalar_lea.vmem [#allocation7], %s1631
          %1634 = dma.done %s1630, 16
        $region72: #{tpu_custom_call.1} parent=67 // pred_fallthru
          _
      $region68: #{tpu_custom_call.1} parent=5 // pred_fallthru
        _
    $region6: #{tpu_custom_call.1} parent=1 // loop_footer
      %s48 = sadd.s32 1, %s44
    $region7: #{tpu_custom_call.1} parent=1 // loop_footer_branch
      %43 = sbr.rel target = $region3
    $region8: #{tpu_custom_call.1} parent=1 // loop_exit
      _
    %1635 = vsyncpa [#allocation8], 1
    %s1636 = scalar_lea.sflag [#allocation8], 1
    %1637 = vsyncpa %s1636, 1

</llo_original>
